<compile_context>
chip_gen: v6e
topology: v6e:2x2x1
jax: 0.10.0
libtpu: 0.0.40
codegen_flags: <defaults>
</compile_context>

<pallas_src>
import jax
import jax.numpy as jnp
from jax.experimental import pallas as pl
from jax.experimental.pallas import tpu as pltpu


NEG_SLOPE = 0.01  # F.leaky_relu default


def _leaky(v):
    # max(v, 0.01*v): 2 VALU ops instead of compare+select
    return jnp.maximum(v, NEG_SLOPE * v)


def neural_vis_kernel(
    x_ref,                                  # (8, TM) bf16, batch on lanes
    enc_w1, enc_b1, enc_w2, enc_b2,         # fused block-diag encoders
    res_w, res_b,                           # (4,128,128) bf16 (I folded), (4,128,1) f32
    p1_w, p1_b, p2_w, p2_b,                 # post block
    o_ref,                                  # (1, TM) f32
):
    bf16, f32 = jnp.bfloat16, jnp.float32
    x = x_ref[...]                                               # (8, TM) bf16

    # Fused encoding3to64 / encoding2to64 (block-diagonal weights):
    # rows 0..63 of out1 == enc3(origin), rows 64..127 == enc2(direction).
    h = _leaky(jnp.dot(enc_w1[...], x, preferred_element_type=f32)
               + enc_b1[...])                                    # (64, TM) f32
    out1 = _leaky(jnp.dot(enc_w2[...], h.astype(bf16),
                          preferred_element_type=f32)
                  + enc_b2[...])                                 # (128, TM) f32

    # 4 x ResBlock128: identity folded into weights -> y = leaky((W+I) @ y + b)
    y = out1
    for k in range(4):
        y = _leaky(jnp.dot(res_w[k], y.astype(bf16),
                           preferred_element_type=f32)
                   + res_b[k])                                   # (128, TM)

    # post block on (out1 + y): Linear(128,64) -> LeakyReLU -> Linear(64,1) -> Sigmoid
    z = out1 + y
    z = _leaky(jnp.dot(p1_w[...], z.astype(bf16),
                       preferred_element_type=f32) + p1_b[...])  # (64, TM)
    z = jnp.dot(p2_w[...], z.astype(bf16),
                preferred_element_type=f32) + p2_b[...]          # (1, TM)
    o_ref[...] = jax.nn.sigmoid(z).astype(o_ref.dtype)


def pack_params(p):
    """Build batch-on-lanes (out, in) weights: fuse encoder branches into
    block-diagonal weights, stack res blocks with the residual identity folded
    in, transpose everything, cast weights to bf16 (biases stay f32).
    Call ONCE and reuse the result across forward calls."""
    f32, bf16 = jnp.float32, jnp.bfloat16

    # encoder stage 1: (64, 8) block-diag; input rows 0:3 = origin, 3:5 = direction
    enc_w1 = jnp.zeros((64, 8), f32)
    enc_w1 = enc_w1.at[0:32, 0:3].set(p["e3_w1"].T).at[32:64, 3:5].set(p["e2_w1"].T)
    enc_b1 = jnp.concatenate([p["e3_b1"], p["e2_b1"]], axis=1).T          # (64, 1)

    # encoder stage 2: (128, 64) block-diag
    enc_w2 = jnp.zeros((128, 64), f32)
    enc_w2 = enc_w2.at[0:64, 0:32].set(p["e3_w2"].T).at[64:128, 32:64].set(p["e2_w2"].T)
    enc_b2 = jnp.concatenate([p["e3_b2"], p["e2_b2"]], axis=1).T          # (128, 1)

    # res blocks: fold residual identity -> y + y@W + b == (W^T + I) @ y + b
    eye = jnp.eye(128, dtype=f32)
    res_w = jnp.stack([p[f"r{i}_w"].T + eye for i in range(4)], axis=0)   # (4,128,128)
    res_b = jnp.stack([p[f"r{i}_b"].T for i in range(4)], axis=0)         # (4,128,1)

    return dict(
        enc_w1=enc_w1.astype(bf16), enc_b1=enc_b1.astype(f32),
        enc_w2=enc_w2.astype(bf16), enc_b2=enc_b2.astype(f32),
        res_w=res_w.astype(bf16),   res_b=res_b.astype(f32),
        p1_w=p["p1_w"].T.astype(bf16), p1_b=p["p1_b"].T.astype(f32),      # (64,128),(64,1)
        p2_w=p["p2_w"].T.astype(bf16), p2_b=p["p2_b"].T.astype(f32),      # (1,64),(1,1)
    )


def neural_vis_forward(x, packed, *, tm=2048):
    """x: (N, 5) float32. packed: output of pack_params. Returns (N, 1) f32.

    tm: rows of the batch processed per grid step (batch maps to lanes).
    Default 2048; sweep 2048-4096 (multiples of 256). vmem_limit_bytes is set
    so that range is safe on v5e/v6e/v7x."""
    N, F = x.shape
    assert F == 5
    assert tm % 128 == 0

    # v7x megacore: keep >=2 grid steps when the batch allows it so both
    # TensorCores get work (grid axis is marked "parallel").
    while tm > 256 and pl.cdiv(N, tm) < 2:
        tm //= 2

    n_pad = pl.cdiv(N, tm) * tm

    # Lane-dense, bf16 input slab: (8, n_pad), rows 0:5 = features, rest zero.
    xt = jnp.zeros((8, n_pad), jnp.bfloat16)
    xt = xt.at[:F, :N].set(x.T.astype(jnp.bfloat16))

    order = ["enc_w1", "enc_b1", "enc_w2", "enc_b2", "res_w", "res_b",
             "p1_w", "p1_b", "p2_w", "p2_b"]
    pvals = [packed[k] for k in order]

    def full_spec(shape):
        # whole (small) parameter array resident in VMEM, same block every step
        nd = len(shape)
        return pl.BlockSpec(shape, lambda i, _nd=nd: (0,) * _nd)

    in_specs = [pl.BlockSpec((8, tm), lambda i: (0, i))]
    in_specs += [full_spec(v.shape) for v in pvals]
    out_spec = pl.BlockSpec((1, tm), lambda i: (0, i))   # lane-dense output slab

    fn = pl.pallas_call(
        neural_vis_kernel,
        out_shape=jax.ShapeDtypeStruct((1, n_pad), jnp.float32),
        grid_spec=pltpu.PrefetchScalarGridSpec(
            num_scalar_prefetch=0,
            grid=(n_pad // tm,),
            in_specs=in_specs,
            out_specs=out_spec,
        ),
        compiler_params=pltpu.CompilerParams(
            # batch tiles are independent -> shard across v7x's 2 TensorCores
            dimension_semantics=("parallel",),
            # explicit cap: raises v5e's 16 MiB scoped default, leaves headroom
            # under v7x's 64 MiB physical VMEM for tm up to ~4096
            vmem_limit_bytes=32 * 1024 * 1024,
        ),
    )
    out = fn(xt, *pvals)                                  # (1, n_pad)
    return out[0, :N].reshape(N, 1)


def init_params(key):
    """Deterministic synthetic parameters with the module's shapes.
    Weights stored as (in_features, out_features); biases as (1, out_features)."""
    def lin(k, fin, fout):
        kw, kb = jax.random.split(k)
        scale = 1.0 / jnp.sqrt(fin)
        w = jax.random.uniform(kw, (fin, fout), jnp.float32, -scale, scale)
        b = jax.random.uniform(kb, (1, fout), jnp.float32, -scale, scale)
        return w, b

    keys = jax.random.split(key, 10)
    p = {}
    p["e3_w1"], p["e3_b1"] = lin(keys[0], 3, 32)
    p["e3_w2"], p["e3_b2"] = lin(keys[1], 32, 64)
    p["e2_w1"], p["e2_b1"] = lin(keys[2], 2, 32)
    p["e2_w2"], p["e2_b2"] = lin(keys[3], 32, 64)
    for i in range(4):
        p[f"r{i}_w"], p[f"r{i}_b"] = lin(keys[4 + i], 128, 128)
    p["p1_w"], p["p1_b"] = lin(keys[8], 128, 64)
    p["p2_w"], p["p2_b"] = lin(keys[9], 64, 1)   # single output
    return p


def reference_forward(x, p):
    """Pure-JAX f32 reference of the PyTorch forward for correctness checking."""
    def leaky(v):
        return jnp.where(v > 0, v, NEG_SLOPE * v)

    origin = x[:, 0:3]
    direction = x[:, 3:5]
    a = leaky(origin @ p["e3_w1"] + p["e3_b1"])
    a = leaky(a @ p["e3_w2"] + p["e3_b2"])
    b = leaky(direction @ p["e2_w1"] + p["e2_b1"])
    b = leaky(b @ p["e2_w2"] + p["e2_b2"])
    out1 = jnp.concatenate([a, b], axis=1)
    y = out1
    for i in range(4):
        y = leaky(y + (y @ p[f"r{i}_w"] + p[f"r{i}_b"]))
    z = out1 + y
    z = leaky(z @ p["p1_w"] + p["p1_b"])
    z = z @ p["p2_w"] + p["p2_b"]
    return jax.nn.sigmoid(z)


if __name__ == "__main__":
    key = jax.random.PRNGKey(0)
    kx, kp = jax.random.split(key)

    # Small test: ragged batch (384 rows, 5 features) with tm=256 exercises the
    # ragged-tail path and a 2-step parallel grid.
    N = 384
    x = jax.random.normal(kx, (N, 5), jnp.float32)
    params = init_params(kp)
    packed = pack_params(params)   # packed once, reused across calls

    fwd = jax.jit(neural_vis_forward, static_argnames=("tm",))
    out = fwd(x, packed, tm=256)
    out = jax.block_until_ready(out)

    ref = reference_forward(x, params)
    assert out.shape == (N, 1)
    # bf16 weights/activations (and folded residual identity) with f32
    # accumulation -> loosened tolerance on the sigmoid outputs.
    assert jnp.allclose(out, ref, atol=3e-2, rtol=3e-2), float(
        jnp.max(jnp.abs(out - ref)))

    print("KERNEL_OK")
</pallas_src>

<mosaic_0001>
module attributes {stable_mosaic.version = 11 : i64} {
  func.func @neural_vis_kernel(%arg0: i32, %arg1: memref<8x256xbf16, #tpu.memory_space<vmem>>, %arg2: memref<64x8xbf16, #tpu.memory_space<vmem>>, %arg3: memref<64x1xf32, #tpu.memory_space<vmem>>, %arg4: memref<128x64xbf16, #tpu.memory_space<vmem>>, %arg5: memref<128x1xf32, #tpu.memory_space<vmem>>, %arg6: memref<4x128x128xbf16, #tpu.memory_space<vmem>>, %arg7: memref<4x128x1xf32, #tpu.memory_space<vmem>>, %arg8: memref<64x128xbf16, #tpu.memory_space<vmem>>, %arg9: memref<64x1xf32, #tpu.memory_space<vmem>>, %arg10: memref<1x64xbf16, #tpu.memory_space<vmem>>, %arg11: memref<1x1xf32, #tpu.memory_space<vmem>>, %arg12: memref<1x256xf32, #tpu.memory_space<vmem>>) attributes {dimension_semantics = [#tpu.dimension_semantics<parallel>], iteration_bounds = array<i64: 2>, scalar_prefetch = 0 : i64, scratch_operands = 0 : i64, tpu.core_type = #tpu.core_type<tc>, window_params = [{transform_indices = @transform_0, window_bounds = array<i64: 8, 256>}, {pipeline_mode = #tpu.pipeline_mode<synchronous>, transform_indices = @transform_1, window_bounds = array<i64: 64, 8>}, {pipeline_mode = #tpu.pipeline_mode<synchronous>, transform_indices = @transform_2, window_bounds = array<i64: 64, 1>}, {pipeline_mode = #tpu.pipeline_mode<synchronous>, transform_indices = @transform_3, window_bounds = array<i64: 128, 64>}, {pipeline_mode = #tpu.pipeline_mode<synchronous>, transform_indices = @transform_4, window_bounds = array<i64: 128, 1>}, {pipeline_mode = #tpu.pipeline_mode<synchronous>, transform_indices = @transform_5, window_bounds = array<i64: 4, 128, 128>}, {pipeline_mode = #tpu.pipeline_mode<synchronous>, transform_indices = @transform_6, window_bounds = array<i64: 4, 128, 1>}, {pipeline_mode = #tpu.pipeline_mode<synchronous>, transform_indices = @transform_7, window_bounds = array<i64: 64, 128>}, {pipeline_mode = #tpu.pipeline_mode<synchronous>, transform_indices = @transform_8, window_bounds = array<i64: 64, 1>}, {pipeline_mode = #tpu.pipeline_mode<synchronous>, transform_indices = @transform_9, window_bounds = array<i64: 1, 64>}, {pipeline_mode = #tpu.pipeline_mode<synchronous>, transform_indices = @transform_10, window_bounds = array<i64: 1, 1>}, {transform_indices = @transform_11, window_bounds = array<i64: 1, 256>}]} {
    %c0 = arith.constant 0 : index
    %c0_0 = arith.constant 0 : index
    %0 = vector.load %arg1[%c0, %c0_0] : memref<8x256xbf16, #tpu.memory_space<vmem>>, vector<8x256xbf16>
    %c0_1 = arith.constant 0 : index
    %c0_2 = arith.constant 0 : index
    %1 = vector.load %arg2[%c0_1, %c0_2] : memref<64x8xbf16, #tpu.memory_space<vmem>>, vector<64x8xbf16>
    %cst = arith.constant dense<0.000000e+00> : vector<64x256xf32>
    %2 = tpu.matmul %1, %0, %cst {dimension_numbers = #tpu.dot_dimension_numbers<[1], [0], [0], [1], [0, 0, 1, 1], [], []>} : vector<64x8xbf16>, vector<8x256xbf16>, vector<64x256xf32> -> vector<64x256xf32>
    %c0_3 = arith.constant 0 : index
    %c0_4 = arith.constant 0 : index
    %3 = vector.load %arg3[%c0_3, %c0_4] : memref<64x1xf32, #tpu.memory_space<vmem>>, vector<64x1xf32>
    %4 = vector.broadcast %3 : vector<64x1xf32> to vector<64x256xf32>
    %5 = arith.addf %2, %4 : vector<64x256xf32>
    %cst_5 = arith.constant 0.00999999977 : f32
    %6 = vector.broadcast %cst_5 : f32 to vector<64x256xf32>
    %7 = arith.mulf %6, %5 : vector<64x256xf32>
    %8 = arith.maximumf %5, %7 : vector<64x256xf32>
    %c0_6 = arith.constant 0 : index
    %c0_7 = arith.constant 0 : index
    %9 = vector.load %arg4[%c0_6, %c0_7] : memref<128x64xbf16, #tpu.memory_space<vmem>>, vector<128x64xbf16>
    %10 = arith.truncf %8 : vector<64x256xf32> to vector<64x256xbf16>
    %cst_8 = arith.constant dense<0.000000e+00> : vector<128x256xf32>
    %11 = tpu.matmul %9, %10, %cst_8 {dimension_numbers = #tpu.dot_dimension_numbers<[1], [0], [0], [1], [0, 0, 1, 1], [], []>} : vector<128x64xbf16>, vector<64x256xbf16>, vector<128x256xf32> -> vector<128x256xf32>
    %c0_9 = arith.constant 0 : index
    %c0_10 = arith.constant 0 : index
    %12 = vector.load %arg5[%c0_9, %c0_10] : memref<128x1xf32, #tpu.memory_space<vmem>>, vector<128x1xf32>
    %13 = vector.broadcast %12 : vector<128x1xf32> to vector<128x256xf32>
    %14 = arith.addf %11, %13 : vector<128x256xf32>
    %cst_11 = arith.constant 0.00999999977 : f32
    %15 = vector.broadcast %cst_11 : f32 to vector<128x256xf32>
    %16 = arith.mulf %15, %14 : vector<128x256xf32>
    %17 = arith.maximumf %14, %16 : vector<128x256xf32>
    %c0_12 = arith.constant 0 : index
    %c0_13 = arith.constant 0 : index
    %c0_14 = arith.constant 0 : index
    %18 = vector.load %arg6[%c0_12, %c0_13, %c0_14] : memref<4x128x128xbf16, #tpu.memory_space<vmem>>, vector<1x128x128xbf16>
    %19 = vector.shape_cast %18 : vector<1x128x128xbf16> to vector<128x128xbf16>
    %20 = arith.truncf %17 : vector<128x256xf32> to vector<128x256xbf16>
    %cst_15 = arith.constant dense<0.000000e+00> : vector<128x256xf32>
    %21 = tpu.matmul %19, %20, %cst_15 {dimension_numbers = #tpu.dot_dimension_numbers<[1], [0], [0], [1], [0, 0, 1, 1], [], []>} : vector<128x128xbf16>, vector<128x256xbf16>, vector<128x256xf32> -> vector<128x256xf32>
    %c0_16 = arith.constant 0 : index
    %c0_17 = arith.constant 0 : index
    %c0_18 = arith.constant 0 : index
    %22 = vector.load %arg7[%c0_16, %c0_17, %c0_18] : memref<4x128x1xf32, #tpu.memory_space<vmem>>, vector<1x128x1xf32>
    %23 = vector.shape_cast %22 : vector<1x128x1xf32> to vector<128x1xf32>
    %24 = vector.broadcast %23 : vector<128x1xf32> to vector<128x256xf32>
    %25 = arith.addf %21, %24 : vector<128x256xf32>
    %cst_19 = arith.constant 0.00999999977 : f32
    %26 = vector.broadcast %cst_19 : f32 to vector<128x256xf32>
    %27 = arith.mulf %26, %25 : vector<128x256xf32>
    %28 = arith.maximumf %25, %27 : vector<128x256xf32>
    %c1 = arith.constant 1 : index
    %c0_20 = arith.constant 0 : index
    %c0_21 = arith.constant 0 : index
    %29 = vector.load %arg6[%c1, %c0_20, %c0_21] : memref<4x128x128xbf16, #tpu.memory_space<vmem>>, vector<1x128x128xbf16>
    %30 = vector.shape_cast %29 : vector<1x128x128xbf16> to vector<128x128xbf16>
    %31 = arith.truncf %28 : vector<128x256xf32> to vector<128x256xbf16>
    %cst_22 = arith.constant dense<0.000000e+00> : vector<128x256xf32>
    %32 = tpu.matmul %30, %31, %cst_22 {dimension_numbers = #tpu.dot_dimension_numbers<[1], [0], [0], [1], [0, 0, 1, 1], [], []>} : vector<128x128xbf16>, vector<128x256xbf16>, vector<128x256xf32> -> vector<128x256xf32>
    %c1_23 = arith.constant 1 : index
    %c0_24 = arith.constant 0 : index
    %c0_25 = arith.constant 0 : index
    %33 = vector.load %arg7[%c1_23, %c0_24, %c0_25] : memref<4x128x1xf32, #tpu.memory_space<vmem>>, vector<1x128x1xf32>
    %34 = vector.shape_cast %33 : vector<1x128x1xf32> to vector<128x1xf32>
    %35 = vector.broadcast %34 : vector<128x1xf32> to vector<128x256xf32>
    %36 = arith.addf %32, %35 : vector<128x256xf32>
    %cst_26 = arith.constant 0.00999999977 : f32
    %37 = vector.broadcast %cst_26 : f32 to vector<128x256xf32>
    %38 = arith.mulf %37, %36 : vector<128x256xf32>
    %39 = arith.maximumf %36, %38 : vector<128x256xf32>
    %c2 = arith.constant 2 : index
    %c0_27 = arith.constant 0 : index
    %c0_28 = arith.constant 0 : index
    %40 = vector.load %arg6[%c2, %c0_27, %c0_28] : memref<4x128x128xbf16, #tpu.memory_space<vmem>>, vector<1x128x128xbf16>
    %41 = vector.shape_cast %40 : vector<1x128x128xbf16> to vector<128x128xbf16>
    %42 = arith.truncf %39 : vector<128x256xf32> to vector<128x256xbf16>
    %cst_29 = arith.constant dense<0.000000e+00> : vector<128x256xf32>
    %43 = tpu.matmul %41, %42, %cst_29 {dimension_numbers = #tpu.dot_dimension_numbers<[1], [0], [0], [1], [0, 0, 1, 1], [], []>} : vector<128x128xbf16>, vector<128x256xbf16>, vector<128x256xf32> -> vector<128x256xf32>
    %c2_30 = arith.constant 2 : index
    %c0_31 = arith.constant 0 : index
    %c0_32 = arith.constant 0 : index
    %44 = vector.load %arg7[%c2_30, %c0_31, %c0_32] : memref<4x128x1xf32, #tpu.memory_space<vmem>>, vector<1x128x1xf32>
    %45 = vector.shape_cast %44 : vector<1x128x1xf32> to vector<128x1xf32>
    %46 = vector.broadcast %45 : vector<128x1xf32> to vector<128x256xf32>
    %47 = arith.addf %43, %46 : vector<128x256xf32>
    %cst_33 = arith.constant 0.00999999977 : f32
    %48 = vector.broadcast %cst_33 : f32 to vector<128x256xf32>
    %49 = arith.mulf %48, %47 : vector<128x256xf32>
    %50 = arith.maximumf %47, %49 : vector<128x256xf32>
    %c3 = arith.constant 3 : index
    %c0_34 = arith.constant 0 : index
    %c0_35 = arith.constant 0 : index
    %51 = vector.load %arg6[%c3, %c0_34, %c0_35] : memref<4x128x128xbf16, #tpu.memory_space<vmem>>, vector<1x128x128xbf16>
    %52 = vector.shape_cast %51 : vector<1x128x128xbf16> to vector<128x128xbf16>
    %53 = arith.truncf %50 : vector<128x256xf32> to vector<128x256xbf16>
    %cst_36 = arith.constant dense<0.000000e+00> : vector<128x256xf32>
    %54 = tpu.matmul %52, %53, %cst_36 {dimension_numbers = #tpu.dot_dimension_numbers<[1], [0], [0], [1], [0, 0, 1, 1], [], []>} : vector<128x128xbf16>, vector<128x256xbf16>, vector<128x256xf32> -> vector<128x256xf32>
    %c3_37 = arith.constant 3 : index
    %c0_38 = arith.constant 0 : index
    %c0_39 = arith.constant 0 : index
    %55 = vector.load %arg7[%c3_37, %c0_38, %c0_39] : memref<4x128x1xf32, #tpu.memory_space<vmem>>, vector<1x128x1xf32>
    %56 = vector.shape_cast %55 : vector<1x128x1xf32> to vector<128x1xf32>
    %57 = vector.broadcast %56 : vector<128x1xf32> to vector<128x256xf32>
    %58 = arith.addf %54, %57 : vector<128x256xf32>
    %cst_40 = arith.constant 0.00999999977 : f32
    %59 = vector.broadcast %cst_40 : f32 to vector<128x256xf32>
    %60 = arith.mulf %59, %58 : vector<128x256xf32>
    %61 = arith.maximumf %58, %60 : vector<128x256xf32>
    %62 = arith.addf %17, %61 : vector<128x256xf32>
    %c0_41 = arith.constant 0 : index
    %c0_42 = arith.constant 0 : index
    %63 = vector.load %arg8[%c0_41, %c0_42] : memref<64x128xbf16, #tpu.memory_space<vmem>>, vector<64x128xbf16>
    %64 = arith.truncf %62 : vector<128x256xf32> to vector<128x256xbf16>
    %cst_43 = arith.constant dense<0.000000e+00> : vector<64x256xf32>
    %65 = tpu.matmul %63, %64, %cst_43 {dimension_numbers = #tpu.dot_dimension_numbers<[1], [0], [0], [1], [0, 0, 1, 1], [], []>} : vector<64x128xbf16>, vector<128x256xbf16>, vector<64x256xf32> -> vector<64x256xf32>
    %c0_44 = arith.constant 0 : index
    %c0_45 = arith.constant 0 : index
    %66 = vector.load %arg9[%c0_44, %c0_45] : memref<64x1xf32, #tpu.memory_space<vmem>>, vector<64x1xf32>
    %67 = vector.broadcast %66 : vector<64x1xf32> to vector<64x256xf32>
    %68 = arith.addf %65, %67 : vector<64x256xf32>
    %cst_46 = arith.constant 0.00999999977 : f32
    %69 = vector.broadcast %cst_46 : f32 to vector<64x256xf32>
    %70 = arith.mulf %69, %68 : vector<64x256xf32>
    %71 = arith.maximumf %68, %70 : vector<64x256xf32>
    %c0_47 = arith.constant 0 : index
    %c0_48 = arith.constant 0 : index
    %72 = vector.load %arg10[%c0_47, %c0_48] : memref<1x64xbf16, #tpu.memory_space<vmem>>, vector<1x64xbf16>
    %73 = arith.truncf %71 : vector<64x256xf32> to vector<64x256xbf16>
    %cst_49 = arith.constant dense<0.000000e+00> : vector<1x256xf32>
    %74 = tpu.matmul %72, %73, %cst_49 {dimension_numbers = #tpu.dot_dimension_numbers<[1], [0], [0], [1], [0, 0, 1, 1], [], []>} : vector<1x64xbf16>, vector<64x256xbf16>, vector<1x256xf32> -> vector<1x256xf32>
    %c0_50 = arith.constant 0 : index
    %c0_51 = arith.constant 0 : index
    %75 = vector.load %arg11[%c0_50, %c0_51] : memref<1x1xf32, #tpu.memory_space<vmem>>, vector<1x1xf32>
    %76 = vector.broadcast %75 : vector<1x1xf32> to vector<1x256xf32>
    %77 = arith.addf %74, %76 : vector<1x256xf32>
    %78 = arith.negf %77 : vector<1x256xf32>
    %79 = math.exp %78 : vector<1x256xf32>
    %cst_52 = arith.constant 1.000000e+00 : f32
    %80 = vector.broadcast %cst_52 : f32 to vector<1x256xf32>
    %81 = arith.addf %80, %79 : vector<1x256xf32>
    %82 = arith.divf %80, %81 : vector<1x256xf32>
    %c0_53 = arith.constant 0 : index
    %c0_54 = arith.constant 0 : index
    %83 = vector.load %arg12[%c0_53, %c0_54] : memref<1x256xf32, #tpu.memory_space<vmem>>, vector<1x256xf32>
    tpu.vector_store %arg12[%c0_53, %c0_54], %82 {strides = array<i32>} : memref<1x256xf32, #tpu.memory_space<vmem>>, vector<1x256xf32>,
    return
  }
  func.func @transform_0(%arg0: i32) -> (i32, i32) {
    %c0_i32 = arith.constant 0 : i32
    %c0_i32_0 = arith.constant 0 : i32
    return %c0_i32, %arg0 : i32, i32
  }
  func.func @transform_1(%arg0: i32) -> (i32, i32) {
    %c0_i32 = arith.constant 0 : i32
    %c0_i32_0 = arith.constant 0 : i32
    %c0_i32_1 = arith.constant 0 : i32
    return %c0_i32, %c0_i32_0 : i32, i32
  }
  func.func @transform_2(%arg0: i32) -> (i32, i32) {
    %c0_i32 = arith.constant 0 : i32
    %c0_i32_0 = arith.constant 0 : i32
    %c0_i32_1 = arith.constant 0 : i32
    return %c0_i32, %c0_i32_0 : i32, i32
  }
  func.func @transform_3(%arg0: i32) -> (i32, i32) {
    %c0_i32 = arith.constant 0 : i32
    %c0_i32_0 = arith.constant 0 : i32
    %c0_i32_1 = arith.constant 0 : i32
    return %c0_i32, %c0_i32_0 : i32, i32
  }
  func.func @transform_4(%arg0: i32) -> (i32, i32) {
    %c0_i32 = arith.constant 0 : i32
    %c0_i32_0 = arith.constant 0 : i32
    %c0_i32_1 = arith.constant 0 : i32
    return %c0_i32, %c0_i32_0 : i32, i32
  }
  func.func @transform_5(%arg0: i32) -> (i32, i32, i32) {
    %c0_i32 = arith.constant 0 : i32
    %c0_i32_0 = arith.constant 0 : i32
    %c0_i32_1 = arith.constant 0 : i32
    %c0_i32_2 = arith.constant 0 : i32
    return %c0_i32, %c0_i32_0, %c0_i32_1 : i32, i32, i32
  }
  func.func @transform_6(%arg0: i32) -> (i32, i32, i32) {
    %c0_i32 = arith.constant 0 : i32
    %c0_i32_0 = arith.constant 0 : i32
    %c0_i32_1 = arith.constant 0 : i32
    %c0_i32_2 = arith.constant 0 : i32
    return %c0_i32, %c0_i32_0, %c0_i32_1 : i32, i32, i32
  }
  func.func @transform_7(%arg0: i32) -> (i32, i32) {
    %c0_i32 = arith.constant 0 : i32
    %c0_i32_0 = arith.constant 0 : i32
    %c0_i32_1 = arith.constant 0 : i32
    return %c0_i32, %c0_i32_0 : i32, i32
  }
  func.func @transform_8(%arg0: i32) -> (i32, i32) {
    %c0_i32 = arith.constant 0 : i32
    %c0_i32_0 = arith.constant 0 : i32
    %c0_i32_1 = arith.constant 0 : i32
    return %c0_i32, %c0_i32_0 : i32, i32
  }
  func.func @transform_9(%arg0: i32) -> (i32, i32) {
    %c0_i32 = arith.constant 0 : i32
    %c0_i32_0 = arith.constant 0 : i32
    %c0_i32_1 = arith.constant 0 : i32
    return %c0_i32, %c0_i32_0 : i32, i32
  }
  func.func @transform_10(%arg0: i32) -> (i32, i32) {
    %c0_i32 = arith.constant 0 : i32
    %c0_i32_0 = arith.constant 0 : i32
    %c0_i32_1 = arith.constant 0 : i32
    return %c0_i32, %c0_i32_0 : i32, i32
  }
  func.func @transform_11(%arg0: i32) -> (i32, i32) {
    %c0_i32 = arith.constant 0 : i32
    %c0_i32_0 = arith.constant 0 : i32
    return %c0_i32, %arg0 : i32, i32
  }
}

</mosaic_0001>

<llo_original>
// kernel: neural_vis_forward.1
$region0: #{neural_vis_forward.1}
  #allocation0 [shape = 'u32[]', space=smem, size = 0x4, offset = 0x4, fixed_abs, tag = 'smem constant byte address 0x4 - core index']
  #allocation1 [shape = 'u32[144,128]{1,0:T(1,128)}', space=vmem, size = 0x12000, scoped, tag = 'internal scratch']
  #allocation2 [shape = 'f32[1,1]{1,0:T(1,128)S(1)}', space=vmem, size = 0x200, scoped, tag = 'scoped memory for neural_vis_forward.1']
  %s0 = inlined_call_operand.vmem [shape: bf16[8,512], index: 0, kind: input, shape index: {}]
  %s1 = inlined_call_operand.vmem [shape: bf16[64,8], index: 1, kind: input, shape index: {}]
  %s2 = inlined_call_operand.vmem [shape: f32[64,1], index: 2, kind: input, shape index: {}]
  %s3 = inlined_call_operand.vmem [shape: bf16[128,64], index: 3, kind: input, shape index: {}]
  %s4 = inlined_call_operand.vmem [shape: f32[128,1], index: 4, kind: input, shape index: {}]
  %s5 = inlined_call_operand.vmem [shape: bf16[4,128,128], index: 5, kind: input, shape index: {}]
  %s6 = inlined_call_operand.vmem [shape: f32[4,128,1], index: 6, kind: input, shape index: {}]
  %s7 = inlined_call_operand.vmem [shape: bf16[64,128], index: 7, kind: input, shape index: {}]
  %s8 = inlined_call_operand.vmem [shape: f32[64,1], index: 8, kind: input, shape index: {}]
  %s9 = inlined_call_operand.vmem [shape: bf16[1,64], index: 9, kind: input, shape index: {}]
  %s10 = inlined_call_operand.<no memory space> [shape: f32[1,1], index: 10, kind: input, shape index: {}]
  %s11 = inlined_call_operand.vmem [shape: f32[1,512], index: 11, kind: output, shape index: {}]
  %s12 = sld [smem:[#allocation0]]
  $region77: #{neural_vis_forward.1} parent=0
    _
  %s14 = ssub.s32 1, %s12
  %s15 = scalar_select 0, %s14, %s12
  %v16 = vstv %s10
  %17 = vst [vmem:[#allocation2] sm:$0x1] %v16
  loop: start=0, step=1, limit=4
  $region2: #{neural_vis_forward.1} parent=0 // loop_pre_header
    _
  $region3: #{neural_vis_forward.1} parent=0 // loop_header
    %s19 = sphi 0, %s23
    %p20 = scmp.ge.s32.totalorder %s19, 4
    %s29 = sphi 0, %s31
    %s32 = sphi 0, %s29
    %s33 = sphi 0, %s32
    %s49 = sphi 0, %s33
    %s53 = sphi 0, %s53
    %s55 = sphi 0, %s53
    %s56 = sphi 0, %s55
    %s70 = sphi 0, %s56
    %s74 = sphi 0, %s74
    %s76 = sphi 0, %s74
    %s77 = sphi 0, %s76
    %s91 = sphi 0, %s77
    %s95 = sphi 0, %s95
    %s97 = sphi 0, %s95
    %s98 = sphi 0, %s97
    %s112 = sphi 0, %s98
    %s116 = sphi 0, %s116
    %s118 = sphi 0, %s116
    %s119 = sphi 0, %s118
    %s133 = sphi 0, %s119
    %s137 = sphi 0, %s137
    %s139 = sphi 0, %s137
    %s140 = sphi 0, %s139
    %s154 = sphi 0, %s140
    %s158 = sphi 0, %s158
    %s160 = sphi 0, %s158
    %s161 = sphi 0, %s160
    %s175 = sphi 0, %s161
    %s179 = sphi 0, %s179
    %s181 = sphi 0, %s179
    %s182 = sphi 0, %s181
    %s196 = sphi 0, %s182
    %s200 = sphi 0, %s200
    %s202 = sphi 0, %s200
    %s203 = sphi 0, %s202
    %s217 = sphi 0, %s203
    %s221 = sphi 0, %s221
    %s223 = sphi 0, %s221
    %s224 = sphi 0, %s223
    %s238 = sphi 0, %s224
    %s242 = sphi 0, %s242
    %s244 = sphi 0, %s242
    %s245 = sphi 0, %s244
    %s259 = sphi 0, %s245
    %s265 = sphi 0, %s267
    %s268 = sphi 0, %s265
    %s269 = sphi 0, %s268
    %s285 = sphi 0, %s269
  $region4: #{neural_vis_forward.1} parent=0 // loop_header_branch
    %22 = sbr.rel (%p20) target = $region8
  $region5: #{neural_vis_forward.1} parent=0 // loop_body
    %s24 = ssub.s32 %s19, 1
    %s25 = ssub.s32 %s19, 2
    %s26 = sadd.s32 %s19, 1
    %s27 = ssub.s32 %s19, %s26
    %p28 = scmp.eq.s32.totalorder %s27, 0
    %s30 = sadd.s32 %s29, 1
    %s31 = scalar_select %p28, %s29, %s30
    %p34 = pneg %p28
    %p35 = scmp.eq.s32.totalorder %s19, 1
    %p36 = por %p34, %p35
    %p37 = scmp.ne.s32.totalorder %s29, %s32
    %p38 = scmp.eq.s32.totalorder %s19, 0
    %p39 = por %p37, %p38
    %p40 = scmp.ne.s32.totalorder %s29, %s32
    %p41 = scmp.eq.s32.totalorder %s24, 1
    %p42 = por %p40, %p41
    %p43 = scmp.ne.s32.totalorder %s32, %s33
    %p44 = scmp.eq.s32.totalorder %s24, 0
    %p45 = por %p43, %p44
    %p46 = scmp.ne.s32.totalorder %s32, %s33
    %p47 = scmp.eq.s32.totalorder %s25, 1
    %p48 = por %p46, %p47
    %p50 = scmp.ne.s32.totalorder %s33, %s49
    %p51 = scmp.eq.s32.totalorder %s25, 0
    %p52 = por %p50, %p51
    %s54 = sadd.s32 %s53, 1
    %p57 = scmp.eq.s32.totalorder %s19, 1
    %p58 = scmp.ne.s32.totalorder %s53, %s55
    %p59 = scmp.eq.s32.totalorder %s19, 0
    %p60 = por %p58, %p59
    %p61 = scmp.ne.s32.totalorder %s53, %s55
    %p62 = scmp.eq.s32.totalorder %s24, 1
    %p63 = por %p61, %p62
    %p64 = scmp.ne.s32.totalorder %s55, %s56
    %p65 = scmp.eq.s32.totalorder %s24, 0
    %p66 = por %p64, %p65
    %p67 = scmp.ne.s32.totalorder %s55, %s56
    %p68 = scmp.eq.s32.totalorder %s25, 1
    %p69 = por %p67, %p68
    %p71 = scmp.ne.s32.totalorder %s56, %s70
    %p72 = scmp.eq.s32.totalorder %s25, 0
    %p73 = por %p71, %p72
    %s75 = sadd.s32 %s74, 1
    %p78 = scmp.eq.s32.totalorder %s19, 1
    %p79 = scmp.ne.s32.totalorder %s74, %s76
    %p80 = scmp.eq.s32.totalorder %s19, 0
    %p81 = por %p79, %p80
    %p82 = scmp.ne.s32.totalorder %s74, %s76
    %p83 = scmp.eq.s32.totalorder %s24, 1
    %p84 = por %p82, %p83
    %p85 = scmp.ne.s32.totalorder %s76, %s77
    %p86 = scmp.eq.s32.totalorder %s24, 0
    %p87 = por %p85, %p86
    %p88 = scmp.ne.s32.totalorder %s76, %s77
    %p89 = scmp.eq.s32.totalorder %s25, 1
    %p90 = por %p88, %p89
    %p92 = scmp.ne.s32.totalorder %s77, %s91
    %p93 = scmp.eq.s32.totalorder %s25, 0
    %p94 = por %p92, %p93
    %s96 = sadd.s32 %s95, 1
    %p99 = scmp.eq.s32.totalorder %s19, 1
    %p100 = scmp.ne.s32.totalorder %s95, %s97
    %p101 = scmp.eq.s32.totalorder %s19, 0
    %p102 = por %p100, %p101
    %p103 = scmp.ne.s32.totalorder %s95, %s97
    %p104 = scmp.eq.s32.totalorder %s24, 1
    %p105 = por %p103, %p104
    %p106 = scmp.ne.s32.totalorder %s97, %s98
    %p107 = scmp.eq.s32.totalorder %s24, 0
    %p108 = por %p106, %p107
    %p109 = scmp.ne.s32.totalorder %s97, %s98
    %p110 = scmp.eq.s32.totalorder %s25, 1
    %p111 = por %p109, %p110
    %p113 = scmp.ne.s32.totalorder %s98, %s112
    %p114 = scmp.eq.s32.totalorder %s25, 0
    %p115 = por %p113, %p114
    %s117 = sadd.s32 %s116, 1
    %p120 = scmp.eq.s32.totalorder %s19, 1
    %p121 = scmp.ne.s32.totalorder %s116, %s118
    %p122 = scmp.eq.s32.totalorder %s19, 0
    %p123 = por %p121, %p122
    %p124 = scmp.ne.s32.totalorder %s116, %s118
    %p125 = scmp.eq.s32.totalorder %s24, 1
    %p126 = por %p124, %p125
    %p127 = scmp.ne.s32.totalorder %s118, %s119
    %p128 = scmp.eq.s32.totalorder %s24, 0
    %p129 = por %p127, %p128
    %p130 = scmp.ne.s32.totalorder %s118, %s119
    %p131 = scmp.eq.s32.totalorder %s25, 1
    %p132 = por %p130, %p131
    %p134 = scmp.ne.s32.totalorder %s119, %s133
    %p135 = scmp.eq.s32.totalorder %s25, 0
    %p136 = por %p134, %p135
    %s138 = sadd.s32 %s137, 1
    %p141 = scmp.eq.s32.totalorder %s19, 1
    %p142 = scmp.ne.s32.totalorder %s137, %s139
    %p143 = scmp.eq.s32.totalorder %s19, 0
    %p144 = por %p142, %p143
    %p145 = scmp.ne.s32.totalorder %s137, %s139
    %p146 = scmp.eq.s32.totalorder %s24, 1
    %p147 = por %p145, %p146
    %p148 = scmp.ne.s32.totalorder %s139, %s140
    %p149 = scmp.eq.s32.totalorder %s24, 0
    %p150 = por %p148, %p149
    %p151 = scmp.ne.s32.totalorder %s139, %s140
    %p152 = scmp.eq.s32.totalorder %s25, 1
    %p153 = por %p151, %p152
    %p155 = scmp.ne.s32.totalorder %s140, %s154
    %p156 = scmp.eq.s32.totalorder %s25, 0
    %p157 = por %p155, %p156
    %s159 = sadd.s32 %s158, 1
    %p162 = scmp.eq.s32.totalorder %s19, 1
    %p163 = scmp.ne.s32.totalorder %s158, %s160
    %p164 = scmp.eq.s32.totalorder %s19, 0
    %p165 = por %p163, %p164
    %p166 = scmp.ne.s32.totalorder %s158, %s160
    %p167 = scmp.eq.s32.totalorder %s24, 1
    %p168 = por %p166, %p167
    %p169 = scmp.ne.s32.totalorder %s160, %s161
    %p170 = scmp.eq.s32.totalorder %s24, 0
    %p171 = por %p169, %p170
    %p172 = scmp.ne.s32.totalorder %s160, %s161
    %p173 = scmp.eq.s32.totalorder %s25, 1
    %p174 = por %p172, %p173
    %p176 = scmp.ne.s32.totalorder %s161, %s175
    %p177 = scmp.eq.s32.totalorder %s25, 0
    %p178 = por %p176, %p177
    %s180 = sadd.s32 %s179, 1
    %p183 = scmp.eq.s32.totalorder %s19, 1
    %p184 = scmp.ne.s32.totalorder %s179, %s181
    %p185 = scmp.eq.s32.totalorder %s19, 0
    %p186 = por %p184, %p185
    %p187 = scmp.ne.s32.totalorder %s179, %s181
    %p188 = scmp.eq.s32.totalorder %s24, 1
    %p189 = por %p187, %p188
    %p190 = scmp.ne.s32.totalorder %s181, %s182
    %p191 = scmp.eq.s32.totalorder %s24, 0
    %p192 = por %p190, %p191
    %p193 = scmp.ne.s32.totalorder %s181, %s182
    %p194 = scmp.eq.s32.totalorder %s25, 1
    %p195 = por %p193, %p194
    %p197 = scmp.ne.s32.totalorder %s182, %s196
    %p198 = scmp.eq.s32.totalorder %s25, 0
    %p199 = por %p197, %p198
    %s201 = sadd.s32 %s200, 1
    %p204 = scmp.eq.s32.totalorder %s19, 1
    %p205 = scmp.ne.s32.totalorder %s200, %s202
    %p206 = scmp.eq.s32.totalorder %s19, 0
    %p207 = por %p205, %p206
    %p208 = scmp.ne.s32.totalorder %s200, %s202
    %p209 = scmp.eq.s32.totalorder %s24, 1
    %p210 = por %p208, %p209
    %p211 = scmp.ne.s32.totalorder %s202, %s203
    %p212 = scmp.eq.s32.totalorder %s24, 0
    %p213 = por %p211, %p212
    %p214 = scmp.ne.s32.totalorder %s202, %s203
    %p215 = scmp.eq.s32.totalorder %s25, 1
    %p216 = por %p214, %p215
    %p218 = scmp.ne.s32.totalorder %s203, %s217
    %p219 = scmp.eq.s32.totalorder %s25, 0
    %p220 = por %p218, %p219
    %s222 = sadd.s32 %s221, 1
    %p225 = scmp.eq.s32.totalorder %s19, 1
    %p226 = scmp.ne.s32.totalorder %s221, %s223
    %p227 = scmp.eq.s32.totalorder %s19, 0
    %p228 = por %p226, %p227
    %p229 = scmp.ne.s32.totalorder %s221, %s223
    %p230 = scmp.eq.s32.totalorder %s24, 1
    %p231 = por %p229, %p230
    %p232 = scmp.ne.s32.totalorder %s223, %s224
    %p233 = scmp.eq.s32.totalorder %s24, 0
    %p234 = por %p232, %p233
    %p235 = scmp.ne.s32.totalorder %s223, %s224
    %p236 = scmp.eq.s32.totalorder %s25, 1
    %p237 = por %p235, %p236
    %p239 = scmp.ne.s32.totalorder %s224, %s238
    %p240 = scmp.eq.s32.totalorder %s25, 0
    %p241 = por %p239, %p240
    %s243 = sadd.s32 %s242, 1
    %p246 = scmp.eq.s32.totalorder %s19, 1
    %p247 = scmp.ne.s32.totalorder %s242, %s244
    %p248 = scmp.eq.s32.totalorder %s19, 0
    %p249 = por %p247, %p248
    %p250 = scmp.ne.s32.totalorder %s242, %s244
    %p251 = scmp.eq.s32.totalorder %s24, 1
    %p252 = por %p250, %p251
    %p253 = scmp.ne.s32.totalorder %s244, %s245
    %p254 = scmp.eq.s32.totalorder %s24, 0
    %p255 = por %p253, %p254
    %p256 = scmp.ne.s32.totalorder %s244, %s245
    %p257 = scmp.eq.s32.totalorder %s25, 1
    %p258 = por %p256, %p257
    %p260 = scmp.ne.s32.totalorder %s245, %s259
    %p261 = scmp.eq.s32.totalorder %s25, 0
    %p262 = por %p260, %p261
    %s263 = ssub.s32 %s19, %s26
    %p264 = scmp.eq.s32.totalorder %s263, 0
    %s266 = sadd.s32 %s265, 1
    %s267 = scalar_select %p264, %s265, %s266
    %p270 = pneg %p264
    %p271 = scmp.eq.s32.totalorder %s19, 1
    %p272 = por %p270, %p271
    %p273 = scmp.ne.s32.totalorder %s265, %s268
    %p274 = scmp.eq.s32.totalorder %s19, 0
    %p275 = por %p273, %p274
    %p276 = scmp.ne.s32.totalorder %s265, %s268
    %p277 = scmp.eq.s32.totalorder %s24, 1
    %p278 = por %p276, %p277
    %p279 = scmp.ne.s32.totalorder %s268, %s269
    %p280 = scmp.eq.s32.totalorder %s24, 0
    %p281 = por %p279, %p280
    %p282 = scmp.ne.s32.totalorder %s268, %s269
    %p283 = scmp.eq.s32.totalorder %s25, 1
    %p284 = por %p282, %p283
    %p286 = scmp.ne.s32.totalorder %s269, %s285
    %p287 = scmp.eq.s32.totalorder %s25, 0
    %p288 = por %p286, %p287
    %p289 = scmp.le.s32.totalorder 1, %s19
    %p290 = scmp.lt.s32.totalorder %s19, 3
    %p291 = pnand %p289, %p290
    %p292 = pneg %p291
    // Predicated region
    $region9: #{neural_vis_forward.1} parent=5 // pred_check
      _
    $region10: #{neural_vis_forward.1} parent=5 // pred_check_branch
      %294 = sbr.rel (%p291) target = $region12
    $region11: #{neural_vis_forward.1} parent=5 // pred_region
      %s295 = ssub.s32 %s19, 1
      // Predicated region
      $region13: #{neural_vis_forward.1} parent=11 // pred_check
        %p296 = pneg %p66
      $region14: #{neural_vis_forward.1} parent=11 // pred_check_branch
        %298 = sbr.rel (%p296) target = $region16
      $region15: #{neural_vis_forward.1} parent=11 // pred_region
        _
      $region16: #{neural_vis_forward.1} parent=11 // pred_fallthru
        _
      // Predicated region
      $region17: #{neural_vis_forward.1} parent=11 // pred_check
        %p299 = pneg %p87
      $region18: #{neural_vis_forward.1} parent=11 // pred_check_branch
        %301 = sbr.rel (%p299) target = $region20
      $region19: #{neural_vis_forward.1} parent=11 // pred_region
        _
      $region20: #{neural_vis_forward.1} parent=11 // pred_fallthru
        _
      // Predicated region
      $region21: #{neural_vis_forward.1} parent=11 // pred_check
        %p302 = pneg %p108
      $region22: #{neural_vis_forward.1} parent=11 // pred_check_branch
        %304 = sbr.rel (%p302) target = $region24
      $region23: #{neural_vis_forward.1} parent=11 // pred_region
        _
      $region24: #{neural_vis_forward.1} parent=11 // pred_fallthru
        _
      // Predicated region
      $region25: #{neural_vis_forward.1} parent=11 // pred_check
        %p305 = pneg %p129
      $region26: #{neural_vis_forward.1} parent=11 // pred_check_branch
        %307 = sbr.rel (%p305) target = $region28
      $region27: #{neural_vis_forward.1} parent=11 // pred_region
        _
      $region28: #{neural_vis_forward.1} parent=11 // pred_fallthru
        _
      // Predicated region
      $region29: #{neural_vis_forward.1} parent=11 // pred_check
        %p308 = pneg %p150
      $region30: #{neural_vis_forward.1} parent=11 // pred_check_branch
        %310 = sbr.rel (%p308) target = $region32
      $region31: #{neural_vis_forward.1} parent=11 // pred_region
        _
      $region32: #{neural_vis_forward.1} parent=11 // pred_fallthru
        _
      // Predicated region
      $region33: #{neural_vis_forward.1} parent=11 // pred_check
        %p311 = pneg %p171
      $region34: #{neural_vis_forward.1} parent=11 // pred_check_branch
        %313 = sbr.rel (%p311) target = $region36
      $region35: #{neural_vis_forward.1} parent=11 // pred_region
        _
      $region36: #{neural_vis_forward.1} parent=11 // pred_fallthru
        _
      // Predicated region
      $region37: #{neural_vis_forward.1} parent=11 // pred_check
        %p314 = pneg %p192
      $region38: #{neural_vis_forward.1} parent=11 // pred_check_branch
        %316 = sbr.rel (%p314) target = $region40
      $region39: #{neural_vis_forward.1} parent=11 // pred_region
        _
      $region40: #{neural_vis_forward.1} parent=11 // pred_fallthru
        _
      // Predicated region
      $region41: #{neural_vis_forward.1} parent=11 // pred_check
        %p317 = pneg %p213
      $region42: #{neural_vis_forward.1} parent=11 // pred_check_branch
        %319 = sbr.rel (%p317) target = $region44
      $region43: #{neural_vis_forward.1} parent=11 // pred_region
        _
      $region44: #{neural_vis_forward.1} parent=11 // pred_fallthru
        _
      // Predicated region
      $region45: #{neural_vis_forward.1} parent=11 // pred_check
        %p320 = pneg %p234
      $region46: #{neural_vis_forward.1} parent=11 // pred_check_branch
        %322 = sbr.rel (%p320) target = $region48
      $region47: #{neural_vis_forward.1} parent=11 // pred_region
        _
      $region48: #{neural_vis_forward.1} parent=11 // pred_fallthru
        _
      // Predicated region
      $region49: #{neural_vis_forward.1} parent=11 // pred_check
        %p323 = pneg %p255
      $region50: #{neural_vis_forward.1} parent=11 // pred_check_branch
        %325 = sbr.rel (%p323) target = $region52
      $region51: #{neural_vis_forward.1} parent=11 // pred_region
        _
      $region52: #{neural_vis_forward.1} parent=11 // pred_fallthru
        _
    $region12: #{neural_vis_forward.1} parent=5 // pred_fallthru
      _
    %p326 = scmp.lt.s32.totalorder %s19, 2
    // Predicated region
    $region53: #{neural_vis_forward.1} parent=5 // pred_check
      %p327 = pneg %p326
    $region54: #{neural_vis_forward.1} parent=5 // pred_check_branch
      %329 = sbr.rel (%p327) target = $region56
    $region55: #{neural_vis_forward.1} parent=5 // pred_region
      // Predicated region
      $region57: #{neural_vis_forward.1} parent=55 // pred_check
        %p330 = pneg %p39
      $region58: #{neural_vis_forward.1} parent=55 // pred_check_branch
        %332 = sbr.rel (%p330) target = $region60
      $region59: #{neural_vis_forward.1} parent=55 // pred_region
        %s333 = smul.u32 2, %s19
        %p334 = scmp.lt.s32.totalorder %s333, 3
        %s335 = scalar_select %p334, %s333, 3
        %s336 = smul.addr %s335, 4
        %s337 = scalar_lea.vmem %s0, %s336
        %s338 = smul.u32 2, %s19
      $region60: #{neural_vis_forward.1} parent=55 // pred_fallthru
        _
    $region56: #{neural_vis_forward.1} parent=5 // pred_fallthru
      _
    %p339 = scmp.le.s32.totalorder 1, %s19
    %p340 = scmp.lt.s32.totalorder %s19, 3
    %p341 = pnand %p339, %p340
    %p342 = pneg %p341
    // Predicated region
    $region61: #{neural_vis_forward.1} parent=5 // pred_check
      _
    $region62: #{neural_vis_forward.1} parent=5 // pred_check_branch
      %344 = sbr.rel (%p341) target = $region64
    $region63: #{neural_vis_forward.1} parent=5 // pred_region
      %s345 = ssub.s32 %s19, 1
      %s346 = smul.u32 2, %s24
      %p347 = scmp.lt.s32.totalorder %s346, 3
      %s348 = scalar_select %p347, %s346, 3
      %s349 = smul.addr %s348, 4
      %s350 = scalar_lea.vmem %s0, %s349
      %p351 = pneg %p45
      %p352 = pneg %p42
      %p353 = pneg %p66
      %p354 = pneg %p63
      %p355 = pneg %p87
      %p356 = pneg %p84
      %p357 = pneg %p108
      %p358 = pneg %p105
      %p359 = pneg %p129
      %p360 = pneg %p126
      %p361 = pneg %p150
      %p362 = pneg %p147
      %p363 = pneg %p171
      %p364 = pneg %p168
      %p365 = pneg %p192
      %p366 = pneg %p189
      %p367 = pneg %p213
      %p368 = pneg %p210
      %p369 = pneg %p234
      %p370 = pneg %p231
      %p371 = pneg %p255
      %p372 = pneg %p252
      %p373 = pneg %p281
      %p374 = pneg %p278
      %s375 = smul.u32 2, %s24
      %p376 = scmp.lt.s32.totalorder %s375, 3
      %s377 = scalar_select %p376, %s375, 3
      %s378 = scalar_lea.vmem %s11, %s377
      %s379 = smul.u32 2, %s24
      %p380 = scmp.lt.s32.totalorder %s379, 3
      %s381 = scalar_select %p380, %s379, 3
      %s382 = smul.addr %s381, 4
      %s383 = scalar_lea.vmem %s0, %s382
      %s384 = smul.u32 2, %s24
      %s385 = smul.u32 2, %s24
      %p386 = scmp.lt.s32.totalorder %s385, 3
      %s387 = scalar_select %p386, %s385, 3
      %s388 = scalar_lea.vmem %s11, %s387
      %s389 = smul.u32 2, %s24
      %v391 = vld [vmem:[%s383] sm:$0xff]
      %v392 = vld [vmem:[%s1] sm:$0xf]
      %v393 = vld [vmem:[%s1 + $0x4] sm:$0xf]
      %v394 = vld [vmem:[%s1 + $0x8] sm:$0xf]
      %v395 = vld [vmem:[%s1 + $0xc] sm:$0xf]
      %v396 = vld [vmem:[%s1 + $0x10] sm:$0xf]
      %v397 = vld [vmem:[%s1 + $0x14] sm:$0xf]
      %v398 = vld [vmem:[%s1 + $0x18] sm:$0xf]
      %v399 = vld [vmem:[%s1 + $0x1c] sm:$0xf]
      %v400 = vld [vmem:[%s2] sm:$0xff]
      %v401 = vld [vmem:[%s2 + $0x8] sm:$0xff]
      %v402 = vld [vmem:[%s2 + $0x10] sm:$0xff]
      %v403 = vld [vmem:[%s2 + $0x18] sm:$0xff]
      %v404 = vld [vmem:[%s2 + $0x20] sm:$0xff]
      %v405 = vld [vmem:[%s2 + $0x28] sm:$0xff]
      %v406 = vld [vmem:[%s2 + $0x30] sm:$0xff]
      %v407 = vld [vmem:[%s2 + $0x38] sm:$0xff]
      %409 = vset.pattern.permute.xlu0 0
      %410 = vperm.xlu0 %409, %v400
      %v411 = vpop.permute.xlu0 %410
      %414 = vset.pattern.permute.xlu0 0
      %415 = vperm.xlu0 %414, %v401
      %v416 = vpop.permute.xlu0 %415
      %419 = vset.pattern.permute.xlu0 0
      %420 = vperm.xlu0 %419, %v402
      %v421 = vpop.permute.xlu0 %420
      %424 = vset.pattern.permute.xlu0 0
      %425 = vperm.xlu0 %424, %v403
      %v426 = vpop.permute.xlu0 %425
      %429 = vset.pattern.permute.xlu0 0
      %430 = vperm.xlu0 %429, %v404
      %v431 = vpop.permute.xlu0 %430
      %434 = vset.pattern.permute.xlu0 0
      %435 = vperm.xlu0 %434, %v405
      %v436 = vpop.permute.xlu0 %435
      %439 = vset.pattern.permute.xlu0 0
      %440 = vperm.xlu0 %439, %v406
      %v441 = vpop.permute.xlu0 %440
      %444 = vset.pattern.permute.xlu0 0
      %445 = vperm.xlu0 %444, %v407
      %v446 = vpop.permute.xlu0 %445
      %v456 = vunpack.c.l.b16 %v392
      %v457 = vunpack.c.l.b16 %v393
      %v458 = vunpack.c.l.b16 %v394
      %v459 = vunpack.c.l.b16 %v395
      %v460 = vunpack.c.l.b16 %v396
      %v461 = vunpack.c.l.b16 %v397
      %v462 = vunpack.c.l.b16 %v398
      %v463 = vunpack.c.l.b16 %v399
      %v464 = vpack.c.b16 %v457, %v456
      %v465 = vpack.c.b16 %v459, %v458
      %v466 = vpack.c.b16 %v461, %v460
      %v467 = vpack.c.b16 %v463, %v462
      %v469 = vunpack.c.l.b16 %v391
      %v470 = vunpack.c.h.b16 %v391
      %v471 = vpack.c.b16 %v469, %v469
      %v472 = vpack.c.b16 %v470, %v470
      %vm473 = vcmask 64512
      %v475 = vsel %vm473, %v464, 0
      %v478 = vsel %vm473, %v465, 0
      %v481 = vsel %vm473, %v466, 0
      %v484 = vsel %vm473, %v467, 0
      %vm486 = vcmask 1043456
      %v488 = vsel %vm486, %v471, 0
      %v491 = vsel %vm486, %v472, 0
      %493 = vmatprep.subr.bf16.mxu0 0
      %494 = vmatpush1.bf16.msra.mxu0 0
      %495 = vmatprep.subr.bf16.mxu0 0
      %496 = vmatpush1.bf16.msra.mxu0 0
      %497 = vmatprep.subr.bf16.mxu0 0
      %498 = vmatpush1.bf16.msra.mxu0 0
      %499 = vmatprep.subr.bf16.mxu0 0
      %500 = vmatpush1.bf16.msra.mxu0 0
      %501 = vmatprep.subr.bf16.mxu0 0
      %502 = vmatpush1.bf16.msra.mxu0 0
      %503 = vmatprep.subr.bf16.mxu0 0
      %504 = vmatpush1.bf16.msra.mxu0 0
      %505 = vmatprep.subr.bf16.mxu0 0
      %506 = vmatpush1.bf16.msra.mxu0 0
      %507 = vmatprep.subr.bf16.mxu0 %v491
      %508 = vmatpush1.bf16.msra.mxu0 %v488
      %509 = vmatprep.subr.bf16.mxu0 0
      %510 = vmatpush2.bf16.msra.mxu0 0
      %511 = vmatprep.subr.bf16.mxu0 0
      %512 = vmatpush2.bf16.msra.mxu0 0
      %513 = vmatprep.subr.bf16.mxu0 0
      %514 = vmatpush2.bf16.msra.mxu0 0
      %515 = vmatprep.subr.bf16.mxu0 0
      %516 = vmatpush2.bf16.msra.mxu0 0
      %517 = vmatprep.subr.bf16.mxu0 0
      %518 = vmatpush2.bf16.msra.mxu0 0
      %519 = vmatprep.subr.bf16.mxu0 0
      %520 = vmatpush2.bf16.msra.mxu0 0
      %521 = vmatprep.subr.bf16.mxu0 0
      %522 = vmatpush2.bf16.msra.mxu0 0
      %523 = vmatprep.subr.bf16.mxu0 0
      %524 = vmatpush2.bf16.msra.mxu0 0
      %525 = vmatprep.mubr.bf16.mxu0 0
      %526 = vmatmul.mubr.bf16.gmra.mxu0 %v475
      %v527 = vpop.f32.mrf.mxu0
      %v528 = vadd.f32 %v411, %v527
      %v529 = vpop.f32.mrf.mxu0
      %v530 = vadd.f32 %v411, %v529
      %v531 = vpop.f32.mrf.mxu0
      %v532 = vadd.f32 %v416, %v531
      %v533 = vpop.f32.mrf.mxu0
      %v534 = vadd.f32 %v416, %v533
      %535 = vmatprep.mubr.bf16.mxu0 0
      %536 = vmatmul.mubr.bf16.gmra.mxu0 %v478
      %v537 = vpop.f32.mrf.mxu0
      %v538 = vadd.f32 %v421, %v537
      %v539 = vpop.f32.mrf.mxu0
      %v540 = vadd.f32 %v421, %v539
      %v541 = vpop.f32.mrf.mxu0
      %v542 = vadd.f32 %v426, %v541
      %v543 = vpop.f32.mrf.mxu0
      %v544 = vadd.f32 %v426, %v543
      %545 = vmatprep.mubr.bf16.mxu0 0
      %546 = vmatmul.mubr.bf16.gmra.mxu0 %v481
      %v547 = vpop.f32.mrf.mxu0
      %v548 = vadd.f32 %v431, %v547
      %v549 = vpop.f32.mrf.mxu0
      %v550 = vadd.f32 %v431, %v549
      %v551 = vpop.f32.mrf.mxu0
      %v552 = vadd.f32 %v436, %v551
      %v553 = vpop.f32.mrf.mxu0
      %v554 = vadd.f32 %v436, %v553
      %555 = vmatprep.mubr.bf16.mxu0 0
      %556 = vmatmul.mubr.bf16.gmra.mxu0 %v484
      %v557 = vpop.f32.mrf.mxu0
      %v558 = vadd.f32 %v441, %v557
      %v559 = vpop.f32.mrf.mxu0
      %v560 = vadd.f32 %v441, %v559
      %v561 = vpop.f32.mrf.mxu0
      %v562 = vadd.f32 %v446, %v561
      %v563 = vpop.f32.mrf.mxu0
      %v564 = vadd.f32 %v446, %v563
      %565 = vdwg.mxu0
      %v566 = vmul.f32 %v528, 0.01
      %v567 = vmul.f32 %v530, 0.01
      %v568 = vmul.f32 %v532, 0.01
      %v569 = vmul.f32 %v534, 0.01
      %v570 = vmul.f32 %v538, 0.01
      %v571 = vmul.f32 %v540, 0.01
      %v572 = vmul.f32 %v542, 0.01
      %v573 = vmul.f32 %v544, 0.01
      %v574 = vmul.f32 %v548, 0.01
      %v575 = vmul.f32 %v550, 0.01
      %v576 = vmul.f32 %v552, 0.01
      %v577 = vmul.f32 %v554, 0.01
      %v578 = vmul.f32 %v558, 0.01
      %v579 = vmul.f32 %v560, 0.01
      %v580 = vmul.f32 %v562, 0.01
      %v581 = vmul.f32 %v564, 0.01
      %v582 = vmax.f32 %v528, %v566
      %v583 = vmax.f32 %v530, %v567
      %v584 = vmax.f32 %v532, %v568
      %v585 = vmax.f32 %v534, %v569
      %v586 = vmax.f32 %v538, %v570
      %v587 = vmax.f32 %v540, %v571
      %v588 = vmax.f32 %v542, %v572
      %v589 = vmax.f32 %v544, %v573
      %v590 = vmax.f32 %v548, %v574
      %v591 = vmax.f32 %v550, %v575
      %v592 = vmax.f32 %v552, %v576
      %v593 = vmax.f32 %v554, %v577
      %v594 = vmax.f32 %v558, %v578
      %v595 = vmax.f32 %v560, %v579
      %v596 = vmax.f32 %v562, %v580
      %v597 = vmax.f32 %v564, %v581
      %v598 = vld [vmem:[%s3] sm:$0xf]
      %v599 = vld [vmem:[%s3 + $0x4] sm:$0xf]
      %v600 = vld [vmem:[%s3 + $0x8] sm:$0xf]
      %v601 = vld [vmem:[%s3 + $0xc] sm:$0xf]
      %v602 = vld [vmem:[%s3 + $0x10] sm:$0xf]
      %v603 = vld [vmem:[%s3 + $0x14] sm:$0xf]
      %v604 = vld [vmem:[%s3 + $0x18] sm:$0xf]
      %v605 = vld [vmem:[%s3 + $0x1c] sm:$0xf]
      %v606 = vld [vmem:[%s3 + $0x20] sm:$0xf]
      %v607 = vld [vmem:[%s3 + $0x24] sm:$0xf]
      %v608 = vld [vmem:[%s3 + $0x28] sm:$0xf]
      %v609 = vld [vmem:[%s3 + $0x2c] sm:$0xf]
      %v610 = vld [vmem:[%s3 + $0x30] sm:$0xf]
      %v611 = vld [vmem:[%s3 + $0x34] sm:$0xf]
      %v612 = vld [vmem:[%s3 + $0x38] sm:$0xf]
      %v613 = vld [vmem:[%s3 + $0x3c] sm:$0xf]
      %v614 = vpack.c.bf16 %v584, %v582
      %v615 = vpack.c.bf16 %v585, %v583
      %v616 = vpack.c.bf16 %v588, %v586
      %v617 = vpack.c.bf16 %v589, %v587
      %v618 = vpack.c.bf16 %v592, %v590
      %v619 = vpack.c.bf16 %v593, %v591
      %v620 = vpack.c.bf16 %v596, %v594
      %v621 = vpack.c.bf16 %v597, %v595
      %v622 = vld [vmem:[%s4] sm:$0xff]
      %v623 = vld [vmem:[%s4 + $0x8] sm:$0xff]
      %v624 = vld [vmem:[%s4 + $0x10] sm:$0xff]
      %v625 = vld [vmem:[%s4 + $0x18] sm:$0xff]
      %v626 = vld [vmem:[%s4 + $0x20] sm:$0xff]
      %v627 = vld [vmem:[%s4 + $0x28] sm:$0xff]
      %v628 = vld [vmem:[%s4 + $0x30] sm:$0xff]
      %v629 = vld [vmem:[%s4 + $0x38] sm:$0xff]
      %v630 = vld [vmem:[%s4 + $0x40] sm:$0xff]
      %v631 = vld [vmem:[%s4 + $0x48] sm:$0xff]
      %v632 = vld [vmem:[%s4 + $0x50] sm:$0xff]
      %v633 = vld [vmem:[%s4 + $0x58] sm:$0xff]
      %v634 = vld [vmem:[%s4 + $0x60] sm:$0xff]
      %v635 = vld [vmem:[%s4 + $0x68] sm:$0xff]
      %v636 = vld [vmem:[%s4 + $0x70] sm:$0xff]
      %v637 = vld [vmem:[%s4 + $0x78] sm:$0xff]
      %639 = vset.pattern.permute.xlu0 0
      %640 = vperm.xlu0 %639, %v622
      %v641 = vpop.permute.xlu0 %640
      %644 = vset.pattern.permute.xlu0 0
      %645 = vperm.xlu0 %644, %v623
      %v646 = vpop.permute.xlu0 %645
      %649 = vset.pattern.permute.xlu0 0
      %650 = vperm.xlu0 %649, %v624
      %v651 = vpop.permute.xlu0 %650
      %654 = vset.pattern.permute.xlu0 0
      %655 = vperm.xlu0 %654, %v625
      %v656 = vpop.permute.xlu0 %655
      %659 = vset.pattern.permute.xlu0 0
      %660 = vperm.xlu0 %659, %v626
      %v661 = vpop.permute.xlu0 %660
      %664 = vset.pattern.permute.xlu0 0
      %665 = vperm.xlu0 %664, %v627
      %v666 = vpop.permute.xlu0 %665
      %669 = vset.pattern.permute.xlu0 0
      %670 = vperm.xlu0 %669, %v628
      %v671 = vpop.permute.xlu0 %670
      %674 = vset.pattern.permute.xlu0 0
      %675 = vperm.xlu0 %674, %v629
      %v676 = vpop.permute.xlu0 %675
      %679 = vset.pattern.permute.xlu0 0
      %680 = vperm.xlu0 %679, %v630
      %v681 = vpop.permute.xlu0 %680
      %684 = vset.pattern.permute.xlu0 0
      %685 = vperm.xlu0 %684, %v631
      %v686 = vpop.permute.xlu0 %685
      %689 = vset.pattern.permute.xlu0 0
      %690 = vperm.xlu0 %689, %v632
      %v691 = vpop.permute.xlu0 %690
      %694 = vset.pattern.permute.xlu0 0
      %695 = vperm.xlu0 %694, %v633
      %v696 = vpop.permute.xlu0 %695
      %699 = vset.pattern.permute.xlu0 0
      %700 = vperm.xlu0 %699, %v634
      %v701 = vpop.permute.xlu0 %700
      %704 = vset.pattern.permute.xlu0 0
      %705 = vperm.xlu0 %704, %v635
      %v706 = vpop.permute.xlu0 %705
      %709 = vset.pattern.permute.xlu0 0
      %710 = vperm.xlu0 %709, %v636
      %v711 = vpop.permute.xlu0 %710
      %714 = vset.pattern.permute.xlu0 0
      %715 = vperm.xlu0 %714, %v637
      %v716 = vpop.permute.xlu0 %715
      %v734 = vunpack.c.l.b16 %v598
      %v735 = vunpack.c.l.b16 %v599
      %v736 = vunpack.c.l.b16 %v600
      %v737 = vunpack.c.l.b16 %v601
      %v738 = vunpack.c.l.b16 %v602
      %v739 = vunpack.c.l.b16 %v603
      %v740 = vunpack.c.l.b16 %v604
      %v741 = vunpack.c.l.b16 %v605
      %v742 = vunpack.c.l.b16 %v606
      %v743 = vunpack.c.l.b16 %v607
      %v744 = vunpack.c.l.b16 %v608
      %v745 = vunpack.c.l.b16 %v609
      %v746 = vunpack.c.l.b16 %v610
      %v747 = vunpack.c.l.b16 %v611
      %v748 = vunpack.c.l.b16 %v612
      %v749 = vunpack.c.l.b16 %v613
      %v750 = vpack.c.b16 %v735, %v734
      %v751 = vpack.c.b16 %v737, %v736
      %v752 = vpack.c.b16 %v739, %v738
      %v753 = vpack.c.b16 %v741, %v740
      %v754 = vpack.c.b16 %v743, %v742
      %v755 = vpack.c.b16 %v745, %v744
      %v756 = vpack.c.b16 %v747, %v746
      %v757 = vpack.c.b16 %v749, %v748
      %vm758 = vcmask 523264
      %v760 = vsel %vm758, %v750, 0
      %v763 = vsel %vm758, %v751, 0
      %v766 = vsel %vm758, %v752, 0
      %v769 = vsel %vm758, %v753, 0
      %v772 = vsel %vm758, %v754, 0
      %v775 = vsel %vm758, %v755, 0
      %v778 = vsel %vm758, %v756, 0
      %v781 = vsel %vm758, %v757, 0
      %783 = vmatprep.subr.bf16.mxu0 0
      %784 = vmatpush1.bf16.msra.mxu0 0
      %785 = vmatprep.subr.bf16.mxu0 0
      %786 = vmatpush1.bf16.msra.mxu0 0
      %787 = vmatprep.subr.bf16.mxu0 0
      %788 = vmatpush1.bf16.msra.mxu0 0
      %789 = vmatprep.subr.bf16.mxu0 0
      %790 = vmatpush1.bf16.msra.mxu0 0
      %791 = vmatprep.subr.bf16.mxu0 %v621
      %792 = vmatpush1.bf16.msra.mxu0 %v620
      %793 = vmatprep.subr.bf16.mxu0 %v619
      %794 = vmatpush1.bf16.msra.mxu0 %v618
      %795 = vmatprep.subr.bf16.mxu0 %v617
      %796 = vmatpush1.bf16.msra.mxu0 %v616
      %797 = vmatprep.subr.bf16.mxu0 %v615
      %798 = vmatpush1.bf16.msra.mxu0 %v614
      %799 = vmatprep.subr.bf16.mxu0 0
      %800 = vmatpush2.bf16.msra.mxu0 0
      %801 = vmatprep.subr.bf16.mxu0 0
      %802 = vmatpush2.bf16.msra.mxu0 0
      %803 = vmatprep.subr.bf16.mxu0 0
      %804 = vmatpush2.bf16.msra.mxu0 0
      %805 = vmatprep.subr.bf16.mxu0 0
      %806 = vmatpush2.bf16.msra.mxu0 0
      %807 = vmatprep.subr.bf16.mxu0 0
      %808 = vmatpush2.bf16.msra.mxu0 0
      %809 = vmatprep.subr.bf16.mxu0 0
      %810 = vmatpush2.bf16.msra.mxu0 0
      %811 = vmatprep.subr.bf16.mxu0 0
      %812 = vmatpush2.bf16.msra.mxu0 0
      %813 = vmatprep.subr.bf16.mxu0 0
      %814 = vmatpush2.bf16.msra.mxu0 0
      %815 = vmatprep.mubr.bf16.mxu0 0
      %816 = vmatmul.mubr.bf16.gmra.mxu0 %v760
      %v817 = vpop.f32.mrf.mxu0
      %v818 = vadd.f32 %v641, %v817
      %v819 = vpop.f32.mrf.mxu0
      %v820 = vadd.f32 %v641, %v819
      %v821 = vpop.f32.mrf.mxu0
      %v822 = vadd.f32 %v646, %v821
      %v823 = vpop.f32.mrf.mxu0
      %v824 = vadd.f32 %v646, %v823
      %825 = vmatprep.mubr.bf16.mxu0 0
      %826 = vmatmul.mubr.bf16.gmra.mxu0 %v763
      %v827 = vpop.f32.mrf.mxu0
      %v828 = vadd.f32 %v651, %v827
      %v829 = vpop.f32.mrf.mxu0
      %v830 = vadd.f32 %v651, %v829
      %v831 = vpop.f32.mrf.mxu0
      %v832 = vadd.f32 %v656, %v831
      %v833 = vpop.f32.mrf.mxu0
      %v834 = vadd.f32 %v656, %v833
      %835 = vmatprep.mubr.bf16.mxu0 0
      %836 = vmatmul.mubr.bf16.gmra.mxu0 %v766
      %v837 = vpop.f32.mrf.mxu0
      %v838 = vadd.f32 %v661, %v837
      %v839 = vpop.f32.mrf.mxu0
      %v840 = vadd.f32 %v661, %v839
      %v841 = vpop.f32.mrf.mxu0
      %v842 = vadd.f32 %v666, %v841
      %v843 = vpop.f32.mrf.mxu0
      %v844 = vadd.f32 %v666, %v843
      %845 = vmatprep.mubr.bf16.mxu0 0
      %846 = vmatmul.mubr.bf16.gmra.mxu0 %v769
      %v847 = vpop.f32.mrf.mxu0
      %v848 = vadd.f32 %v671, %v847
      %v849 = vpop.f32.mrf.mxu0
      %v850 = vadd.f32 %v671, %v849
      %v851 = vpop.f32.mrf.mxu0
      %v852 = vadd.f32 %v676, %v851
      %v853 = vpop.f32.mrf.mxu0
      %v854 = vadd.f32 %v676, %v853
      %855 = vmatprep.mubr.bf16.mxu0 0
      %856 = vmatmul.mubr.bf16.gmra.mxu0 %v772
      %v857 = vpop.f32.mrf.mxu0
      %v858 = vadd.f32 %v681, %v857
      %v859 = vpop.f32.mrf.mxu0
      %v860 = vadd.f32 %v681, %v859
      %v861 = vpop.f32.mrf.mxu0
      %v862 = vadd.f32 %v686, %v861
      %v863 = vpop.f32.mrf.mxu0
      %v864 = vadd.f32 %v686, %v863
      %865 = vmatprep.mubr.bf16.mxu0 0
      %866 = vmatmul.mubr.bf16.gmra.mxu0 %v775
      %v867 = vpop.f32.mrf.mxu0
      %v868 = vadd.f32 %v691, %v867
      %v869 = vpop.f32.mrf.mxu0
      %v870 = vadd.f32 %v691, %v869
      %v871 = vpop.f32.mrf.mxu0
      %v872 = vadd.f32 %v696, %v871
      %v873 = vpop.f32.mrf.mxu0
      %v874 = vadd.f32 %v696, %v873
      %875 = vmatprep.mubr.bf16.mxu0 0
      %876 = vmatmul.mubr.bf16.gmra.mxu0 %v778
      %v877 = vpop.f32.mrf.mxu0
      %v878 = vadd.f32 %v701, %v877
      %v879 = vpop.f32.mrf.mxu0
      %v880 = vadd.f32 %v701, %v879
      %v881 = vpop.f32.mrf.mxu0
      %v882 = vadd.f32 %v706, %v881
      %v883 = vpop.f32.mrf.mxu0
      %v884 = vadd.f32 %v706, %v883
      %885 = vmatprep.mubr.bf16.mxu0 0
      %886 = vmatmul.mubr.bf16.gmra.mxu0 %v781
      %v887 = vpop.f32.mrf.mxu0
      %v888 = vadd.f32 %v711, %v887
      %v889 = vpop.f32.mrf.mxu0
      %v890 = vadd.f32 %v711, %v889
      %v891 = vpop.f32.mrf.mxu0
      %v892 = vadd.f32 %v716, %v891
      %v893 = vpop.f32.mrf.mxu0
      %v894 = vadd.f32 %v716, %v893
      %895 = vdwg.mxu0
      %v896 = vmul.f32 %v818, 0.01
      %v897 = vmul.f32 %v820, 0.01
      %v898 = vmul.f32 %v822, 0.01
      %v899 = vmul.f32 %v824, 0.01
      %v900 = vmul.f32 %v828, 0.01
      %v901 = vmul.f32 %v830, 0.01
      %v902 = vmul.f32 %v832, 0.01
      %v903 = vmul.f32 %v834, 0.01
      %v904 = vmul.f32 %v838, 0.01
      %v905 = vmul.f32 %v840, 0.01
      %v906 = vmul.f32 %v842, 0.01
      %v907 = vmul.f32 %v844, 0.01
      %v908 = vmul.f32 %v848, 0.01
      %v909 = vmul.f32 %v850, 0.01
      %v910 = vmul.f32 %v852, 0.01
      %v911 = vmul.f32 %v854, 0.01
      %v912 = vmul.f32 %v858, 0.01
      %v913 = vmul.f32 %v860, 0.01
      %v914 = vmul.f32 %v862, 0.01
      %v915 = vmul.f32 %v864, 0.01
      %v916 = vmul.f32 %v868, 0.01
      %v917 = vmul.f32 %v870, 0.01
      %v918 = vmul.f32 %v872, 0.01
      %v919 = vmul.f32 %v874, 0.01
      %v920 = vmul.f32 %v878, 0.01
      %v921 = vmul.f32 %v880, 0.01
      %v922 = vmul.f32 %v882, 0.01
      %v923 = vmul.f32 %v884, 0.01
      %v924 = vmul.f32 %v888, 0.01
      %v925 = vmul.f32 %v890, 0.01
      %v926 = vmul.f32 %v892, 0.01
      %v927 = vmul.f32 %v894, 0.01
      %v928 = vmax.f32 %v818, %v896
      %v929 = vmax.f32 %v820, %v897
      %v930 = vmax.f32 %v822, %v898
      %v931 = vmax.f32 %v824, %v899
      %v932 = vmax.f32 %v828, %v900
      %v933 = vmax.f32 %v830, %v901
      %v934 = vmax.f32 %v832, %v902
      %v935 = vmax.f32 %v834, %v903
      %v936 = vmax.f32 %v838, %v904
      %v937 = vmax.f32 %v840, %v905
      %v938 = vmax.f32 %v842, %v906
      %v939 = vmax.f32 %v844, %v907
      %v940 = vmax.f32 %v848, %v908
      %v941 = vmax.f32 %v850, %v909
      %v942 = vmax.f32 %v852, %v910
      %v943 = vmax.f32 %v854, %v911
      %v944 = vmax.f32 %v858, %v912
      %v945 = vmax.f32 %v860, %v913
      %v946 = vmax.f32 %v862, %v914
      %v947 = vmax.f32 %v864, %v915
      %v948 = vmax.f32 %v868, %v916
      %v949 = vmax.f32 %v870, %v917
      %v950 = vmax.f32 %v872, %v918
      %v951 = vmax.f32 %v874, %v919
      %v952 = vmax.f32 %v878, %v920
      %v953 = vmax.f32 %v880, %v921
      %v954 = vmax.f32 %v882, %v922
      %v955 = vmax.f32 %v884, %v923
      %v956 = vmax.f32 %v888, %v924
      %v957 = vmax.f32 %v890, %v925
      %v958 = vmax.f32 %v892, %v926
      %v959 = vmax.f32 %v894, %v927
      %v960 = vld [vmem:[%s5] sm:$0xf]
      %v961 = vld [vmem:[%s5 + $0x4] sm:$0xf]
      %v962 = vld [vmem:[%s5 + $0x8] sm:$0xf]
      %v963 = vld [vmem:[%s5 + $0xc] sm:$0xf]
      %v964 = vld [vmem:[%s5 + $0x10] sm:$0xf]
      %v965 = vld [vmem:[%s5 + $0x14] sm:$0xf]
      %v966 = vld [vmem:[%s5 + $0x18] sm:$0xf]
      %v967 = vld [vmem:[%s5 + $0x1c] sm:$0xf]
      %v968 = vld [vmem:[%s5 + $0x20] sm:$0xf]
      %v969 = vld [vmem:[%s5 + $0x24] sm:$0xf]
      %v970 = vld [vmem:[%s5 + $0x28] sm:$0xf]
      %v971 = vld [vmem:[%s5 + $0x2c] sm:$0xf]
      %v972 = vld [vmem:[%s5 + $0x30] sm:$0xf]
      %v973 = vld [vmem:[%s5 + $0x34] sm:$0xf]
      %v974 = vld [vmem:[%s5 + $0x38] sm:$0xf]
      %v975 = vld [vmem:[%s5 + $0x3c] sm:$0xf]
      %v976 = vpack.c.bf16 %v930, %v928
      %v977 = vpack.c.bf16 %v931, %v929
      %v978 = vpack.c.bf16 %v934, %v932
      %v979 = vpack.c.bf16 %v935, %v933
      %v980 = vpack.c.bf16 %v938, %v936
      %v981 = vpack.c.bf16 %v939, %v937
      %v982 = vpack.c.bf16 %v942, %v940
      %v983 = vpack.c.bf16 %v943, %v941
      %v984 = vpack.c.bf16 %v946, %v944
      %v985 = vpack.c.bf16 %v947, %v945
      %v986 = vpack.c.bf16 %v950, %v948
      %v987 = vpack.c.bf16 %v951, %v949
      %v988 = vpack.c.bf16 %v954, %v952
      %v989 = vpack.c.bf16 %v955, %v953
      %v990 = vpack.c.bf16 %v958, %v956
      %v991 = vpack.c.bf16 %v959, %v957
      %v992 = vld [vmem:[%s6] sm:$0xff]
      %v993 = vld [vmem:[%s6 + $0x8] sm:$0xff]
      %v994 = vld [vmem:[%s6 + $0x10] sm:$0xff]
      %v995 = vld [vmem:[%s6 + $0x18] sm:$0xff]
      %v996 = vld [vmem:[%s6 + $0x20] sm:$0xff]
      %v997 = vld [vmem:[%s6 + $0x28] sm:$0xff]
      %v998 = vld [vmem:[%s6 + $0x30] sm:$0xff]
      %v999 = vld [vmem:[%s6 + $0x38] sm:$0xff]
      %v1000 = vld [vmem:[%s6 + $0x40] sm:$0xff]
      %v1001 = vld [vmem:[%s6 + $0x48] sm:$0xff]
      %v1002 = vld [vmem:[%s6 + $0x50] sm:$0xff]
      %v1003 = vld [vmem:[%s6 + $0x58] sm:$0xff]
      %v1004 = vld [vmem:[%s6 + $0x60] sm:$0xff]
      %v1005 = vld [vmem:[%s6 + $0x68] sm:$0xff]
      %v1006 = vld [vmem:[%s6 + $0x70] sm:$0xff]
      %v1007 = vld [vmem:[%s6 + $0x78] sm:$0xff]
      %1009 = vset.pattern.permute.xlu0 0
      %1010 = vperm.xlu0 %1009, %v992
      %v1011 = vpop.permute.xlu0 %1010
      %1014 = vset.pattern.permute.xlu0 0
      %1015 = vperm.xlu0 %1014, %v993
      %v1016 = vpop.permute.xlu0 %1015
      %1019 = vset.pattern.permute.xlu0 0
      %1020 = vperm.xlu0 %1019, %v994
      %v1021 = vpop.permute.xlu0 %1020
      %1024 = vset.pattern.permute.xlu0 0
      %1025 = vperm.xlu0 %1024, %v995
      %v1026 = vpop.permute.xlu0 %1025
      %1029 = vset.pattern.permute.xlu0 0
      %1030 = vperm.xlu0 %1029, %v996
      %v1031 = vpop.permute.xlu0 %1030
      %1034 = vset.pattern.permute.xlu0 0
      %1035 = vperm.xlu0 %1034, %v997
      %v1036 = vpop.permute.xlu0 %1035
      %1039 = vset.pattern.permute.xlu0 0
      %1040 = vperm.xlu0 %1039, %v998
      %v1041 = vpop.permute.xlu0 %1040
      %1044 = vset.pattern.permute.xlu0 0
      %1045 = vperm.xlu0 %1044, %v999
      %v1046 = vpop.permute.xlu0 %1045
      %1049 = vset.pattern.permute.xlu0 0
      %1050 = vperm.xlu0 %1049, %v1000
      %v1051 = vpop.permute.xlu0 %1050
      %1054 = vset.pattern.permute.xlu0 0
      %1055 = vperm.xlu0 %1054, %v1001
      %v1056 = vpop.permute.xlu0 %1055
      %1059 = vset.pattern.permute.xlu0 0
      %1060 = vperm.xlu0 %1059, %v1002
      %v1061 = vpop.permute.xlu0 %1060
      %1064 = vset.pattern.permute.xlu0 0
      %1065 = vperm.xlu0 %1064, %v1003
      %v1066 = vpop.permute.xlu0 %1065
      %1069 = vset.pattern.permute.xlu0 0
      %1070 = vperm.xlu0 %1069, %v1004
      %v1071 = vpop.permute.xlu0 %1070
      %1074 = vset.pattern.permute.xlu0 0
      %1075 = vperm.xlu0 %1074, %v1005
      %v1076 = vpop.permute.xlu0 %1075
      %1079 = vset.pattern.permute.xlu0 0
      %1080 = vperm.xlu0 %1079, %v1006
      %v1081 = vpop.permute.xlu0 %1080
      %1084 = vset.pattern.permute.xlu0 0
      %1085 = vperm.xlu0 %1084, %v1007
      %v1086 = vpop.permute.xlu0 %1085
      %v1104 = vunpack.c.l.b16 %v960
      %v1105 = vunpack.c.l.b16 %v961
      %v1106 = vunpack.c.l.b16 %v962
      %v1107 = vunpack.c.l.b16 %v963
      %v1108 = vunpack.c.l.b16 %v964
      %v1109 = vunpack.c.l.b16 %v965
      %v1110 = vunpack.c.l.b16 %v966
      %v1111 = vunpack.c.l.b16 %v967
      %v1112 = vunpack.c.l.b16 %v968
      %v1113 = vunpack.c.l.b16 %v969
      %v1114 = vunpack.c.l.b16 %v970
      %v1115 = vunpack.c.l.b16 %v971
      %v1116 = vunpack.c.l.b16 %v972
      %v1117 = vunpack.c.l.b16 %v973
      %v1118 = vunpack.c.l.b16 %v974
      %v1119 = vunpack.c.l.b16 %v975
      %v1120 = vpack.c.b16 %v1105, %v1104
      %v1121 = vpack.c.b16 %v1107, %v1106
      %v1122 = vpack.c.b16 %v1109, %v1108
      %v1123 = vpack.c.b16 %v1111, %v1110
      %v1124 = vpack.c.b16 %v1113, %v1112
      %v1125 = vpack.c.b16 %v1115, %v1114
      %v1126 = vpack.c.b16 %v1117, %v1116
      %v1127 = vpack.c.b16 %v1119, %v1118
      %1136 = vmatprep.subr.bf16.mxu0 %v991
      %1137 = vmatpush1.bf16.msra.mxu0 %v990
      %1138 = vmatprep.subr.bf16.mxu0 %v989
      %1139 = vmatpush1.bf16.msra.mxu0 %v988
      %1140 = vmatprep.subr.bf16.mxu0 %v987
      %1141 = vmatpush1.bf16.msra.mxu0 %v986
      %1142 = vmatprep.subr.bf16.mxu0 %v985
      %1143 = vmatpush1.bf16.msra.mxu0 %v984
      %1144 = vmatprep.subr.bf16.mxu0 %v983
      %1145 = vmatpush1.bf16.msra.mxu0 %v982
      %1146 = vmatprep.subr.bf16.mxu0 %v981
      %1147 = vmatpush1.bf16.msra.mxu0 %v980
      %1148 = vmatprep.subr.bf16.mxu0 %v979
      %1149 = vmatpush1.bf16.msra.mxu0 %v978
      %1150 = vmatprep.subr.bf16.mxu0 %v977
      %1151 = vmatpush1.bf16.msra.mxu0 %v976
      %1152 = vmatprep.subr.bf16.mxu0 0
      %1153 = vmatpush2.bf16.msra.mxu0 0
      %1154 = vmatprep.subr.bf16.mxu0 0
      %1155 = vmatpush2.bf16.msra.mxu0 0
      %1156 = vmatprep.subr.bf16.mxu0 0
      %1157 = vmatpush2.bf16.msra.mxu0 0
      %1158 = vmatprep.subr.bf16.mxu0 0
      %1159 = vmatpush2.bf16.msra.mxu0 0
      %1160 = vmatprep.subr.bf16.mxu0 0
      %1161 = vmatpush2.bf16.msra.mxu0 0
      %1162 = vmatprep.subr.bf16.mxu0 0
      %1163 = vmatpush2.bf16.msra.mxu0 0
      %1164 = vmatprep.subr.bf16.mxu0 0
      %1165 = vmatpush2.bf16.msra.mxu0 0
      %1166 = vmatprep.subr.bf16.mxu0 0
      %1167 = vmatpush2.bf16.msra.mxu0 0
      %1168 = vmatprep.mubr.bf16.mxu0 0
      %1169 = vmatmul.mubr.bf16.gmra.mxu0 %v1120
      %v1170 = vpop.f32.mrf.mxu0
      %v1171 = vadd.f32 %v1011, %v1170
      %v1172 = vpop.f32.mrf.mxu0
      %v1173 = vadd.f32 %v1011, %v1172
      %v1174 = vpop.f32.mrf.mxu0
      %v1175 = vadd.f32 %v1016, %v1174
      %v1176 = vpop.f32.mrf.mxu0
      %v1177 = vadd.f32 %v1016, %v1176
      %1178 = vmatprep.mubr.bf16.mxu0 0
      %1179 = vmatmul.mubr.bf16.gmra.mxu0 %v1121
      %v1180 = vpop.f32.mrf.mxu0
      %v1181 = vadd.f32 %v1021, %v1180
      %v1182 = vpop.f32.mrf.mxu0
      %v1183 = vadd.f32 %v1021, %v1182
      %v1184 = vpop.f32.mrf.mxu0
      %v1185 = vadd.f32 %v1026, %v1184
      %v1186 = vpop.f32.mrf.mxu0
      %v1187 = vadd.f32 %v1026, %v1186
      %1188 = vmatprep.mubr.bf16.mxu0 0
      %1189 = vmatmul.mubr.bf16.gmra.mxu0 %v1122
      %v1190 = vpop.f32.mrf.mxu0
      %v1191 = vadd.f32 %v1031, %v1190
      %v1192 = vpop.f32.mrf.mxu0
      %v1193 = vadd.f32 %v1031, %v1192
      %v1194 = vpop.f32.mrf.mxu0
      %v1195 = vadd.f32 %v1036, %v1194
      %v1196 = vpop.f32.mrf.mxu0
      %v1197 = vadd.f32 %v1036, %v1196
      %1198 = vmatprep.mubr.bf16.mxu0 0
      %1199 = vmatmul.mubr.bf16.gmra.mxu0 %v1123
      %v1200 = vpop.f32.mrf.mxu0
      %v1201 = vadd.f32 %v1041, %v1200
      %v1202 = vpop.f32.mrf.mxu0
      %v1203 = vadd.f32 %v1041, %v1202
      %v1204 = vpop.f32.mrf.mxu0
      %v1205 = vadd.f32 %v1046, %v1204
      %v1206 = vpop.f32.mrf.mxu0
      %v1207 = vadd.f32 %v1046, %v1206
      %1208 = vmatprep.mubr.bf16.mxu0 0
      %1209 = vmatmul.mubr.bf16.gmra.mxu0 %v1124
      %v1210 = vpop.f32.mrf.mxu0
      %v1211 = vadd.f32 %v1051, %v1210
      %v1212 = vpop.f32.mrf.mxu0
      %v1213 = vadd.f32 %v1051, %v1212
      %v1214 = vpop.f32.mrf.mxu0
      %v1215 = vadd.f32 %v1056, %v1214
      %v1216 = vpop.f32.mrf.mxu0
      %v1217 = vadd.f32 %v1056, %v1216
      %1218 = vmatprep.mubr.bf16.mxu0 0
      %1219 = vmatmul.mubr.bf16.gmra.mxu0 %v1125
      %v1220 = vpop.f32.mrf.mxu0
      %v1221 = vadd.f32 %v1061, %v1220
      %v1222 = vpop.f32.mrf.mxu0
      %v1223 = vadd.f32 %v1061, %v1222
      %v1224 = vpop.f32.mrf.mxu0
      %v1225 = vadd.f32 %v1066, %v1224
      %v1226 = vpop.f32.mrf.mxu0
      %v1227 = vadd.f32 %v1066, %v1226
      %1228 = vmatprep.mubr.bf16.mxu0 0
      %1229 = vmatmul.mubr.bf16.gmra.mxu0 %v1126
      %v1230 = vpop.f32.mrf.mxu0
      %v1231 = vadd.f32 %v1071, %v1230
      %v1232 = vpop.f32.mrf.mxu0
      %v1233 = vadd.f32 %v1071, %v1232
      %v1234 = vpop.f32.mrf.mxu0
      %v1235 = vadd.f32 %v1076, %v1234
      %v1236 = vpop.f32.mrf.mxu0
      %v1237 = vadd.f32 %v1076, %v1236
      %1238 = vmatprep.mubr.bf16.mxu0 0
      %1239 = vmatmul.mubr.bf16.gmra.mxu0 %v1127
      %v1240 = vpop.f32.mrf.mxu0
      %v1241 = vadd.f32 %v1081, %v1240
      %v1242 = vpop.f32.mrf.mxu0
      %v1243 = vadd.f32 %v1081, %v1242
      %v1244 = vpop.f32.mrf.mxu0
      %v1245 = vadd.f32 %v1086, %v1244
      %v1246 = vpop.f32.mrf.mxu0
      %v1247 = vadd.f32 %v1086, %v1246
      %1248 = vdwg.mxu0
      %v1249 = vmul.f32 %v1171, 0.01
      %v1250 = vmul.f32 %v1173, 0.01
      %v1251 = vmul.f32 %v1175, 0.01
      %v1252 = vmul.f32 %v1177, 0.01
      %v1253 = vmul.f32 %v1181, 0.01
      %v1254 = vmul.f32 %v1183, 0.01
      %v1255 = vmul.f32 %v1185, 0.01
      %v1256 = vmul.f32 %v1187, 0.01
      %v1257 = vmul.f32 %v1191, 0.01
      %v1258 = vmul.f32 %v1193, 0.01
      %v1259 = vmul.f32 %v1195, 0.01
      %v1260 = vmul.f32 %v1197, 0.01
      %v1261 = vmul.f32 %v1201, 0.01
      %v1262 = vmul.f32 %v1203, 0.01
      %v1263 = vmul.f32 %v1205, 0.01
      %v1264 = vmul.f32 %v1207, 0.01
      %v1265 = vmul.f32 %v1211, 0.01
      %v1266 = vmul.f32 %v1213, 0.01
      %v1267 = vmul.f32 %v1215, 0.01
      %v1268 = vmul.f32 %v1217, 0.01
      %v1269 = vmul.f32 %v1221, 0.01
      %v1270 = vmul.f32 %v1223, 0.01
      %v1271 = vmul.f32 %v1225, 0.01
      %v1272 = vmul.f32 %v1227, 0.01
      %v1273 = vmul.f32 %v1231, 0.01
      %v1274 = vmul.f32 %v1233, 0.01
      %v1275 = vmul.f32 %v1235, 0.01
      %v1276 = vmul.f32 %v1237, 0.01
      %v1277 = vmul.f32 %v1241, 0.01
      %v1278 = vmul.f32 %v1243, 0.01
      %v1279 = vmul.f32 %v1245, 0.01
      %v1280 = vmul.f32 %v1247, 0.01
      %v1281 = vmax.f32 %v1171, %v1249
      %v1282 = vmax.f32 %v1173, %v1250
      %v1283 = vmax.f32 %v1175, %v1251
      %v1284 = vmax.f32 %v1177, %v1252
      %v1285 = vmax.f32 %v1181, %v1253
      %v1286 = vmax.f32 %v1183, %v1254
      %v1287 = vmax.f32 %v1185, %v1255
      %v1288 = vmax.f32 %v1187, %v1256
      %v1289 = vmax.f32 %v1191, %v1257
      %v1290 = vmax.f32 %v1193, %v1258
      %v1291 = vmax.f32 %v1195, %v1259
      %v1292 = vmax.f32 %v1197, %v1260
      %v1293 = vmax.f32 %v1201, %v1261
      %v1294 = vmax.f32 %v1203, %v1262
      %v1295 = vmax.f32 %v1205, %v1263
      %v1296 = vmax.f32 %v1207, %v1264
      %v1297 = vmax.f32 %v1211, %v1265
      %v1298 = vmax.f32 %v1213, %v1266
      %v1299 = vmax.f32 %v1215, %v1267
      %v1300 = vmax.f32 %v1217, %v1268
      %v1301 = vmax.f32 %v1221, %v1269
      %v1302 = vmax.f32 %v1223, %v1270
      %v1303 = vmax.f32 %v1225, %v1271
      %v1304 = vmax.f32 %v1227, %v1272
      %v1305 = vmax.f32 %v1231, %v1273
      %v1306 = vmax.f32 %v1233, %v1274
      %v1307 = vmax.f32 %v1235, %v1275
      %v1308 = vmax.f32 %v1237, %v1276
      %v1309 = vmax.f32 %v1241, %v1277
      %v1310 = vmax.f32 %v1243, %v1278
      %v1311 = vmax.f32 %v1245, %v1279
      %v1312 = vmax.f32 %v1247, %v1280
      %s1313 = scalar_lea.vmem %s5, 64
      %v1314 = vld [vmem:[%s1313] sm:$0xf]
      %v1315 = vld [vmem:[%s1313 + $0x4] sm:$0xf]
      %v1316 = vld [vmem:[%s1313 + $0x8] sm:$0xf]
      %v1317 = vld [vmem:[%s1313 + $0xc] sm:$0xf]
      %v1318 = vld [vmem:[%s1313 + $0x10] sm:$0xf]
      %v1319 = vld [vmem:[%s1313 + $0x14] sm:$0xf]
      %v1320 = vld [vmem:[%s1313 + $0x18] sm:$0xf]
      %v1321 = vld [vmem:[%s1313 + $0x1c] sm:$0xf]
      %v1322 = vld [vmem:[%s1313 + $0x20] sm:$0xf]
      %v1323 = vld [vmem:[%s1313 + $0x24] sm:$0xf]
      %v1324 = vld [vmem:[%s1313 + $0x28] sm:$0xf]
      %v1325 = vld [vmem:[%s1313 + $0x2c] sm:$0xf]
      %v1326 = vld [vmem:[%s1313 + $0x30] sm:$0xf]
      %v1327 = vld [vmem:[%s1313 + $0x34] sm:$0xf]
      %v1328 = vld [vmem:[%s1313 + $0x38] sm:$0xf]
      %v1329 = vld [vmem:[%s1313 + $0x3c] sm:$0xf]
      %v1330 = vpack.c.bf16 %v1283, %v1281
      %v1331 = vpack.c.bf16 %v1284, %v1282
      %v1332 = vpack.c.bf16 %v1287, %v1285
      %v1333 = vpack.c.bf16 %v1288, %v1286
      %v1334 = vpack.c.bf16 %v1291, %v1289
      %v1335 = vpack.c.bf16 %v1292, %v1290
      %v1336 = vpack.c.bf16 %v1295, %v1293
      %v1337 = vpack.c.bf16 %v1296, %v1294
      %v1338 = vpack.c.bf16 %v1299, %v1297
      %v1339 = vpack.c.bf16 %v1300, %v1298
      %v1340 = vpack.c.bf16 %v1303, %v1301
      %v1341 = vpack.c.bf16 %v1304, %v1302
      %v1342 = vpack.c.bf16 %v1307, %v1305
      %v1343 = vpack.c.bf16 %v1308, %v1306
      %v1344 = vpack.c.bf16 %v1311, %v1309
      %v1345 = vpack.c.bf16 %v1312, %v1310
      %s1346 = scalar_lea.vmem %s6, 128
      %v1347 = vld [vmem:[%s1346] sm:$0xff]
      %v1348 = vld [vmem:[%s1346 + $0x8] sm:$0xff]
      %v1349 = vld [vmem:[%s1346 + $0x10] sm:$0xff]
      %v1350 = vld [vmem:[%s1346 + $0x18] sm:$0xff]
      %v1351 = vld [vmem:[%s1346 + $0x20] sm:$0xff]
      %v1352 = vld [vmem:[%s1346 + $0x28] sm:$0xff]
      %v1353 = vld [vmem:[%s1346 + $0x30] sm:$0xff]
      %v1354 = vld [vmem:[%s1346 + $0x38] sm:$0xff]
      %v1355 = vld [vmem:[%s1346 + $0x40] sm:$0xff]
      %v1356 = vld [vmem:[%s1346 + $0x48] sm:$0xff]
      %v1357 = vld [vmem:[%s1346 + $0x50] sm:$0xff]
      %v1358 = vld [vmem:[%s1346 + $0x58] sm:$0xff]
      %v1359 = vld [vmem:[%s1346 + $0x60] sm:$0xff]
      %v1360 = vld [vmem:[%s1346 + $0x68] sm:$0xff]
      %v1361 = vld [vmem:[%s1346 + $0x70] sm:$0xff]
      %v1362 = vld [vmem:[%s1346 + $0x78] sm:$0xff]
      %1364 = vset.pattern.permute.xlu0 0
      %1365 = vperm.xlu0 %1364, %v1347
      %v1366 = vpop.permute.xlu0 %1365
      %1369 = vset.pattern.permute.xlu0 0
      %1370 = vperm.xlu0 %1369, %v1348
      %v1371 = vpop.permute.xlu0 %1370
      %1374 = vset.pattern.permute.xlu0 0
      %1375 = vperm.xlu0 %1374, %v1349
      %v1376 = vpop.permute.xlu0 %1375
      %1379 = vset.pattern.permute.xlu0 0
      %1380 = vperm.xlu0 %1379, %v1350
      %v1381 = vpop.permute.xlu0 %1380
      %1384 = vset.pattern.permute.xlu0 0
      %1385 = vperm.xlu0 %1384, %v1351
      %v1386 = vpop.permute.xlu0 %1385
      %1389 = vset.pattern.permute.xlu0 0
      %1390 = vperm.xlu0 %1389, %v1352
      %v1391 = vpop.permute.xlu0 %1390
      %1394 = vset.pattern.permute.xlu0 0
      %1395 = vperm.xlu0 %1394, %v1353
      %v1396 = vpop.permute.xlu0 %1395
      %1399 = vset.pattern.permute.xlu0 0
      %1400 = vperm.xlu0 %1399, %v1354
      %v1401 = vpop.permute.xlu0 %1400
      %1404 = vset.pattern.permute.xlu0 0
      %1405 = vperm.xlu0 %1404, %v1355
      %v1406 = vpop.permute.xlu0 %1405
      %1409 = vset.pattern.permute.xlu0 0
      %1410 = vperm.xlu0 %1409, %v1356
      %v1411 = vpop.permute.xlu0 %1410
      %1414 = vset.pattern.permute.xlu0 0
      %1415 = vperm.xlu0 %1414, %v1357
      %v1416 = vpop.permute.xlu0 %1415
      %1419 = vset.pattern.permute.xlu0 0
      %1420 = vperm.xlu0 %1419, %v1358
      %v1421 = vpop.permute.xlu0 %1420
      %1424 = vset.pattern.permute.xlu0 0
      %1425 = vperm.xlu0 %1424, %v1359
      %v1426 = vpop.permute.xlu0 %1425
      %1429 = vset.pattern.permute.xlu0 0
      %1430 = vperm.xlu0 %1429, %v1360
      %v1431 = vpop.permute.xlu0 %1430
      %1434 = vset.pattern.permute.xlu0 0
      %1435 = vperm.xlu0 %1434, %v1361
      %v1436 = vpop.permute.xlu0 %1435
      %1439 = vset.pattern.permute.xlu0 0
      %1440 = vperm.xlu0 %1439, %v1362
      %v1441 = vpop.permute.xlu0 %1440
      %v1459 = vunpack.c.l.b16 %v1314
      %v1460 = vunpack.c.l.b16 %v1315
      %v1461 = vunpack.c.l.b16 %v1316
      %v1462 = vunpack.c.l.b16 %v1317
      %v1463 = vunpack.c.l.b16 %v1318
      %v1464 = vunpack.c.l.b16 %v1319
      %v1465 = vunpack.c.l.b16 %v1320
      %v1466 = vunpack.c.l.b16 %v1321
      %v1467 = vunpack.c.l.b16 %v1322
      %v1468 = vunpack.c.l.b16 %v1323
      %v1469 = vunpack.c.l.b16 %v1324
      %v1470 = vunpack.c.l.b16 %v1325
      %v1471 = vunpack.c.l.b16 %v1326
      %v1472 = vunpack.c.l.b16 %v1327
      %v1473 = vunpack.c.l.b16 %v1328
      %v1474 = vunpack.c.l.b16 %v1329
      %v1475 = vpack.c.b16 %v1460, %v1459
      %v1476 = vpack.c.b16 %v1462, %v1461
      %v1477 = vpack.c.b16 %v1464, %v1463
      %v1478 = vpack.c.b16 %v1466, %v1465
      %v1479 = vpack.c.b16 %v1468, %v1467
      %v1480 = vpack.c.b16 %v1470, %v1469
      %v1481 = vpack.c.b16 %v1472, %v1471
      %v1482 = vpack.c.b16 %v1474, %v1473
      %1491 = vmatprep.subr.bf16.mxu0 %v1345
      %1492 = vmatpush1.bf16.msra.mxu0 %v1344
      %1493 = vmatprep.subr.bf16.mxu0 %v1343
      %1494 = vmatpush1.bf16.msra.mxu0 %v1342
      %1495 = vmatprep.subr.bf16.mxu0 %v1341
      %1496 = vmatpush1.bf16.msra.mxu0 %v1340
      %1497 = vmatprep.subr.bf16.mxu0 %v1339
      %1498 = vmatpush1.bf16.msra.mxu0 %v1338
      %1499 = vmatprep.subr.bf16.mxu0 %v1337
      %1500 = vmatpush1.bf16.msra.mxu0 %v1336
      %1501 = vmatprep.subr.bf16.mxu0 %v1335
      %1502 = vmatpush1.bf16.msra.mxu0 %v1334
      %1503 = vmatprep.subr.bf16.mxu0 %v1333
      %1504 = vmatpush1.bf16.msra.mxu0 %v1332
      %1505 = vmatprep.subr.bf16.mxu0 %v1331
      %1506 = vmatpush1.bf16.msra.mxu0 %v1330
      %1507 = vmatprep.subr.bf16.mxu0 0
      %1508 = vmatpush2.bf16.msra.mxu0 0
      %1509 = vmatprep.subr.bf16.mxu0 0
      %1510 = vmatpush2.bf16.msra.mxu0 0
      %1511 = vmatprep.subr.bf16.mxu0 0
      %1512 = vmatpush2.bf16.msra.mxu0 0
      %1513 = vmatprep.subr.bf16.mxu0 0
      %1514 = vmatpush2.bf16.msra.mxu0 0
      %1515 = vmatprep.subr.bf16.mxu0 0
      %1516 = vmatpush2.bf16.msra.mxu0 0
      %1517 = vmatprep.subr.bf16.mxu0 0
      %1518 = vmatpush2.bf16.msra.mxu0 0
      %1519 = vmatprep.subr.bf16.mxu0 0
      %1520 = vmatpush2.bf16.msra.mxu0 0
      %1521 = vmatprep.subr.bf16.mxu0 0
      %1522 = vmatpush2.bf16.msra.mxu0 0
      %1523 = vmatprep.mubr.bf16.mxu0 0
      %1524 = vmatmul.mubr.bf16.gmra.mxu0 %v1475
      %v1525 = vpop.f32.mrf.mxu0
      %v1526 = vadd.f32 %v1366, %v1525
      %v1527 = vpop.f32.mrf.mxu0
      %v1528 = vadd.f32 %v1366, %v1527
      %v1529 = vpop.f32.mrf.mxu0
      %v1530 = vadd.f32 %v1371, %v1529
      %v1531 = vpop.f32.mrf.mxu0
      %v1532 = vadd.f32 %v1371, %v1531
      %1533 = vmatprep.mubr.bf16.mxu0 0
      %1534 = vmatmul.mubr.bf16.gmra.mxu0 %v1476
      %v1535 = vpop.f32.mrf.mxu0
      %v1536 = vadd.f32 %v1376, %v1535
      %v1537 = vpop.f32.mrf.mxu0
      %v1538 = vadd.f32 %v1376, %v1537
      %v1539 = vpop.f32.mrf.mxu0
      %v1540 = vadd.f32 %v1381, %v1539
      %v1541 = vpop.f32.mrf.mxu0
      %v1542 = vadd.f32 %v1381, %v1541
      %1543 = vmatprep.mubr.bf16.mxu0 0
      %1544 = vmatmul.mubr.bf16.gmra.mxu0 %v1477
      %v1545 = vpop.f32.mrf.mxu0
      %v1546 = vadd.f32 %v1386, %v1545
      %v1547 = vpop.f32.mrf.mxu0
      %v1548 = vadd.f32 %v1386, %v1547
      %v1549 = vpop.f32.mrf.mxu0
      %v1550 = vadd.f32 %v1391, %v1549
      %v1551 = vpop.f32.mrf.mxu0
      %v1552 = vadd.f32 %v1391, %v1551
      %1553 = vmatprep.mubr.bf16.mxu0 0
      %1554 = vmatmul.mubr.bf16.gmra.mxu0 %v1478
      %v1555 = vpop.f32.mrf.mxu0
      %v1556 = vadd.f32 %v1396, %v1555
      %v1557 = vpop.f32.mrf.mxu0
      %v1558 = vadd.f32 %v1396, %v1557
      %v1559 = vpop.f32.mrf.mxu0
      %v1560 = vadd.f32 %v1401, %v1559
      %v1561 = vpop.f32.mrf.mxu0
      %v1562 = vadd.f32 %v1401, %v1561
      %1563 = vmatprep.mubr.bf16.mxu0 0
      %1564 = vmatmul.mubr.bf16.gmra.mxu0 %v1479
      %v1565 = vpop.f32.mrf.mxu0
      %v1566 = vadd.f32 %v1406, %v1565
      %v1567 = vpop.f32.mrf.mxu0
      %v1568 = vadd.f32 %v1406, %v1567
      %v1569 = vpop.f32.mrf.mxu0
      %v1570 = vadd.f32 %v1411, %v1569
      %v1571 = vpop.f32.mrf.mxu0
      %v1572 = vadd.f32 %v1411, %v1571
      %1573 = vmatprep.mubr.bf16.mxu0 0
      %1574 = vmatmul.mubr.bf16.gmra.mxu0 %v1480
      %v1575 = vpop.f32.mrf.mxu0
      %v1576 = vadd.f32 %v1416, %v1575
      %v1577 = vpop.f32.mrf.mxu0
      %v1578 = vadd.f32 %v1416, %v1577
      %v1579 = vpop.f32.mrf.mxu0
      %v1580 = vadd.f32 %v1421, %v1579
      %v1581 = vpop.f32.mrf.mxu0
      %v1582 = vadd.f32 %v1421, %v1581
      %1583 = vmatprep.mubr.bf16.mxu0 0
      %1584 = vmatmul.mubr.bf16.gmra.mxu0 %v1481
      %v1585 = vpop.f32.mrf.mxu0
      %v1586 = vadd.f32 %v1426, %v1585
      %v1587 = vpop.f32.mrf.mxu0
      %v1588 = vadd.f32 %v1426, %v1587
      %v1589 = vpop.f32.mrf.mxu0
      %v1590 = vadd.f32 %v1431, %v1589
      %v1591 = vpop.f32.mrf.mxu0
      %v1592 = vadd.f32 %v1431, %v1591
      %1593 = vmatprep.mubr.bf16.mxu0 0
      %1594 = vmatmul.mubr.bf16.gmra.mxu0 %v1482
      %v1595 = vpop.f32.mrf.mxu0
      %v1596 = vadd.f32 %v1436, %v1595
      %v1597 = vpop.f32.mrf.mxu0
      %v1598 = vadd.f32 %v1436, %v1597
      %v1599 = vpop.f32.mrf.mxu0
      %v1600 = vadd.f32 %v1441, %v1599
      %v1601 = vpop.f32.mrf.mxu0
      %v1602 = vadd.f32 %v1441, %v1601
      %1603 = vdwg.mxu0
      %v1604 = vmul.f32 %v1526, 0.01
      %v1605 = vmul.f32 %v1528, 0.01
      %v1606 = vmul.f32 %v1530, 0.01
      %v1607 = vmul.f32 %v1532, 0.01
      %v1608 = vmul.f32 %v1536, 0.01
      %v1609 = vmul.f32 %v1538, 0.01
      %v1610 = vmul.f32 %v1540, 0.01
      %v1611 = vmul.f32 %v1542, 0.01
      %v1612 = vmul.f32 %v1546, 0.01
      %v1613 = vmul.f32 %v1548, 0.01
      %v1614 = vmul.f32 %v1550, 0.01
      %v1615 = vmul.f32 %v1552, 0.01
      %v1616 = vmul.f32 %v1556, 0.01
      %v1617 = vmul.f32 %v1558, 0.01
      %v1618 = vmul.f32 %v1560, 0.01
      %v1619 = vmul.f32 %v1562, 0.01
      %v1620 = vmul.f32 %v1566, 0.01
      %v1621 = vmul.f32 %v1568, 0.01
      %v1622 = vmul.f32 %v1570, 0.01
      %v1623 = vmul.f32 %v1572, 0.01
      %v1624 = vmul.f32 %v1576, 0.01
      %v1625 = vmul.f32 %v1578, 0.01
      %v1626 = vmul.f32 %v1580, 0.01
      %v1627 = vmul.f32 %v1582, 0.01
      %v1628 = vmul.f32 %v1586, 0.01
      %v1629 = vmul.f32 %v1588, 0.01
      %v1630 = vmul.f32 %v1590, 0.01
      %v1631 = vmul.f32 %v1592, 0.01
      %v1632 = vmul.f32 %v1596, 0.01
      %v1633 = vmul.f32 %v1598, 0.01
      %v1634 = vmul.f32 %v1600, 0.01
      %v1635 = vmul.f32 %v1602, 0.01
      %v1636 = vmax.f32 %v1526, %v1604
      %v1637 = vmax.f32 %v1528, %v1605
      %v1638 = vmax.f32 %v1530, %v1606
      %v1639 = vmax.f32 %v1532, %v1607
      %v1640 = vmax.f32 %v1536, %v1608
      %v1641 = vmax.f32 %v1538, %v1609
      %v1642 = vmax.f32 %v1540, %v1610
      %v1643 = vmax.f32 %v1542, %v1611
      %v1644 = vmax.f32 %v1546, %v1612
      %v1645 = vmax.f32 %v1548, %v1613
      %v1646 = vmax.f32 %v1550, %v1614
      %v1647 = vmax.f32 %v1552, %v1615
      %v1648 = vmax.f32 %v1556, %v1616
      %v1649 = vmax.f32 %v1558, %v1617
      %v1650 = vmax.f32 %v1560, %v1618
      %v1651 = vmax.f32 %v1562, %v1619
      %v1652 = vmax.f32 %v1566, %v1620
      %v1653 = vmax.f32 %v1568, %v1621
      %v1654 = vmax.f32 %v1570, %v1622
      %v1655 = vmax.f32 %v1572, %v1623
      %v1656 = vmax.f32 %v1576, %v1624
      %v1657 = vmax.f32 %v1578, %v1625
      %v1658 = vmax.f32 %v1580, %v1626
      %v1659 = vmax.f32 %v1582, %v1627
      %v1660 = vmax.f32 %v1586, %v1628
      %v1661 = vmax.f32 %v1588, %v1629
      %v1662 = vmax.f32 %v1590, %v1630
      %v1663 = vmax.f32 %v1592, %v1631
      %v1664 = vmax.f32 %v1596, %v1632
      %v1665 = vmax.f32 %v1598, %v1633
      %v1666 = vmax.f32 %v1600, %v1634
      %v1667 = vmax.f32 %v1602, %v1635
      %s1668 = scalar_lea.vmem %s5, 128
      %v1669 = vld [vmem:[%s1668] sm:$0xf]
      %v1670 = vld [vmem:[%s1668 + $0x4] sm:$0xf]
      %v1671 = vld [vmem:[%s1668 + $0x8] sm:$0xf]
      %v1672 = vld [vmem:[%s1668 + $0xc] sm:$0xf]
      %v1673 = vld [vmem:[%s1668 + $0x10] sm:$0xf]
      %v1674 = vld [vmem:[%s1668 + $0x14] sm:$0xf]
      %v1675 = vld [vmem:[%s1668 + $0x18] sm:$0xf]
      %v1676 = vld [vmem:[%s1668 + $0x1c] sm:$0xf]
      %v1677 = vld [vmem:[%s1668 + $0x20] sm:$0xf]
      %v1678 = vld [vmem:[%s1668 + $0x24] sm:$0xf]
      %v1679 = vld [vmem:[%s1668 + $0x28] sm:$0xf]
      %v1680 = vld [vmem:[%s1668 + $0x2c] sm:$0xf]
      %v1681 = vld [vmem:[%s1668 + $0x30] sm:$0xf]
      %v1682 = vld [vmem:[%s1668 + $0x34] sm:$0xf]
      %v1683 = vld [vmem:[%s1668 + $0x38] sm:$0xf]
      %v1684 = vld [vmem:[%s1668 + $0x3c] sm:$0xf]
      %v1685 = vpack.c.bf16 %v1638, %v1636
      %v1686 = vpack.c.bf16 %v1639, %v1637
      %v1687 = vpack.c.bf16 %v1642, %v1640
      %v1688 = vpack.c.bf16 %v1643, %v1641
      %v1689 = vpack.c.bf16 %v1646, %v1644
      %v1690 = vpack.c.bf16 %v1647, %v1645
      %v1691 = vpack.c.bf16 %v1650, %v1648
      %v1692 = vpack.c.bf16 %v1651, %v1649
      %v1693 = vpack.c.bf16 %v1654, %v1652
      %v1694 = vpack.c.bf16 %v1655, %v1653
      %v1695 = vpack.c.bf16 %v1658, %v1656
      %v1696 = vpack.c.bf16 %v1659, %v1657
      %v1697 = vpack.c.bf16 %v1662, %v1660
      %v1698 = vpack.c.bf16 %v1663, %v1661
      %v1699 = vpack.c.bf16 %v1666, %v1664
      %v1700 = vpack.c.bf16 %v1667, %v1665
      %s1701 = scalar_lea.vmem %s6, 256
      %v1702 = vld [vmem:[%s1701] sm:$0xff]
      %v1703 = vld [vmem:[%s1701 + $0x8] sm:$0xff]
      %v1704 = vld [vmem:[%s1701 + $0x10] sm:$0xff]
      %v1705 = vld [vmem:[%s1701 + $0x18] sm:$0xff]
      %v1706 = vld [vmem:[%s1701 + $0x20] sm:$0xff]
      %v1707 = vld [vmem:[%s1701 + $0x28] sm:$0xff]
      %v1708 = vld [vmem:[%s1701 + $0x30] sm:$0xff]
      %v1709 = vld [vmem:[%s1701 + $0x38] sm:$0xff]
      %v1710 = vld [vmem:[%s1701 + $0x40] sm:$0xff]
      %v1711 = vld [vmem:[%s1701 + $0x48] sm:$0xff]
      %v1712 = vld [vmem:[%s1701 + $0x50] sm:$0xff]
      %v1713 = vld [vmem:[%s1701 + $0x58] sm:$0xff]
      %v1714 = vld [vmem:[%s1701 + $0x60] sm:$0xff]
      %v1715 = vld [vmem:[%s1701 + $0x68] sm:$0xff]
      %v1716 = vld [vmem:[%s1701 + $0x70] sm:$0xff]
      %v1717 = vld [vmem:[%s1701 + $0x78] sm:$0xff]
      %1719 = vset.pattern.permute.xlu0 0
      %1720 = vperm.xlu0 %1719, %v1702
      %v1721 = vpop.permute.xlu0 %1720
      %1724 = vset.pattern.permute.xlu0 0
      %1725 = vperm.xlu0 %1724, %v1703
      %v1726 = vpop.permute.xlu0 %1725
      %1729 = vset.pattern.permute.xlu0 0
      %1730 = vperm.xlu0 %1729, %v1704
      %v1731 = vpop.permute.xlu0 %1730
      %1734 = vset.pattern.permute.xlu0 0
      %1735 = vperm.xlu0 %1734, %v1705
      %v1736 = vpop.permute.xlu0 %1735
      %1739 = vset.pattern.permute.xlu0 0
      %1740 = vperm.xlu0 %1739, %v1706
      %v1741 = vpop.permute.xlu0 %1740
      %1744 = vset.pattern.permute.xlu0 0
      %1745 = vperm.xlu0 %1744, %v1707
      %v1746 = vpop.permute.xlu0 %1745
      %1749 = vset.pattern.permute.xlu0 0
      %1750 = vperm.xlu0 %1749, %v1708
      %v1751 = vpop.permute.xlu0 %1750
      %1754 = vset.pattern.permute.xlu0 0
      %1755 = vperm.xlu0 %1754, %v1709
      %v1756 = vpop.permute.xlu0 %1755
      %1759 = vset.pattern.permute.xlu0 0
      %1760 = vperm.xlu0 %1759, %v1710
      %v1761 = vpop.permute.xlu0 %1760
      %1764 = vset.pattern.permute.xlu0 0
      %1765 = vperm.xlu0 %1764, %v1711
      %v1766 = vpop.permute.xlu0 %1765
      %1769 = vset.pattern.permute.xlu0 0
      %1770 = vperm.xlu0 %1769, %v1712
      %v1771 = vpop.permute.xlu0 %1770
      %1774 = vset.pattern.permute.xlu0 0
      %1775 = vperm.xlu0 %1774, %v1713
      %v1776 = vpop.permute.xlu0 %1775
      %1779 = vset.pattern.permute.xlu0 0
      %1780 = vperm.xlu0 %1779, %v1714
      %v1781 = vpop.permute.xlu0 %1780
      %1784 = vset.pattern.permute.xlu0 0
      %1785 = vperm.xlu0 %1784, %v1715
      %v1786 = vpop.permute.xlu0 %1785
      %1789 = vset.pattern.permute.xlu0 0
      %1790 = vperm.xlu0 %1789, %v1716
      %v1791 = vpop.permute.xlu0 %1790
      %1794 = vset.pattern.permute.xlu0 0
      %1795 = vperm.xlu0 %1794, %v1717
      %v1796 = vpop.permute.xlu0 %1795
      %v1814 = vunpack.c.l.b16 %v1669
      %v1815 = vunpack.c.l.b16 %v1670
      %v1816 = vunpack.c.l.b16 %v1671
      %v1817 = vunpack.c.l.b16 %v1672
      %v1818 = vunpack.c.l.b16 %v1673
      %v1819 = vunpack.c.l.b16 %v1674
      %v1820 = vunpack.c.l.b16 %v1675
      %v1821 = vunpack.c.l.b16 %v1676
      %v1822 = vunpack.c.l.b16 %v1677
      %v1823 = vunpack.c.l.b16 %v1678
      %v1824 = vunpack.c.l.b16 %v1679
      %v1825 = vunpack.c.l.b16 %v1680
      %v1826 = vunpack.c.l.b16 %v1681
      %v1827 = vunpack.c.l.b16 %v1682
      %v1828 = vunpack.c.l.b16 %v1683
      %v1829 = vunpack.c.l.b16 %v1684
      %v1830 = vpack.c.b16 %v1815, %v1814
      %v1831 = vpack.c.b16 %v1817, %v1816
      %v1832 = vpack.c.b16 %v1819, %v1818
      %v1833 = vpack.c.b16 %v1821, %v1820
      %v1834 = vpack.c.b16 %v1823, %v1822
      %v1835 = vpack.c.b16 %v1825, %v1824
      %v1836 = vpack.c.b16 %v1827, %v1826
      %v1837 = vpack.c.b16 %v1829, %v1828
      %1846 = vmatprep.subr.bf16.mxu0 %v1700
      %1847 = vmatpush1.bf16.msra.mxu0 %v1699
      %1848 = vmatprep.subr.bf16.mxu0 %v1698
      %1849 = vmatpush1.bf16.msra.mxu0 %v1697
      %1850 = vmatprep.subr.bf16.mxu0 %v1696
      %1851 = vmatpush1.bf16.msra.mxu0 %v1695
      %1852 = vmatprep.subr.bf16.mxu0 %v1694
      %1853 = vmatpush1.bf16.msra.mxu0 %v1693
      %1854 = vmatprep.subr.bf16.mxu0 %v1692
      %1855 = vmatpush1.bf16.msra.mxu0 %v1691
      %1856 = vmatprep.subr.bf16.mxu0 %v1690
      %1857 = vmatpush1.bf16.msra.mxu0 %v1689
      %1858 = vmatprep.subr.bf16.mxu0 %v1688
      %1859 = vmatpush1.bf16.msra.mxu0 %v1687
      %1860 = vmatprep.subr.bf16.mxu0 %v1686
      %1861 = vmatpush1.bf16.msra.mxu0 %v1685
      %1862 = vmatprep.subr.bf16.mxu0 0
      %1863 = vmatpush2.bf16.msra.mxu0 0
      %1864 = vmatprep.subr.bf16.mxu0 0
      %1865 = vmatpush2.bf16.msra.mxu0 0
      %1866 = vmatprep.subr.bf16.mxu0 0
      %1867 = vmatpush2.bf16.msra.mxu0 0
      %1868 = vmatprep.subr.bf16.mxu0 0
      %1869 = vmatpush2.bf16.msra.mxu0 0
      %1870 = vmatprep.subr.bf16.mxu0 0
      %1871 = vmatpush2.bf16.msra.mxu0 0
      %1872 = vmatprep.subr.bf16.mxu0 0
      %1873 = vmatpush2.bf16.msra.mxu0 0
      %1874 = vmatprep.subr.bf16.mxu0 0
      %1875 = vmatpush2.bf16.msra.mxu0 0
      %1876 = vmatprep.subr.bf16.mxu0 0
      %1877 = vmatpush2.bf16.msra.mxu0 0
      %1878 = vmatprep.mubr.bf16.mxu0 0
      %1879 = vmatmul.mubr.bf16.gmra.mxu0 %v1830
      %v1880 = vpop.f32.mrf.mxu0
      %v1881 = vadd.f32 %v1721, %v1880
      %v1882 = vpop.f32.mrf.mxu0
      %v1883 = vadd.f32 %v1721, %v1882
      %v1884 = vpop.f32.mrf.mxu0
      %v1885 = vadd.f32 %v1726, %v1884
      %v1886 = vpop.f32.mrf.mxu0
      %v1887 = vadd.f32 %v1726, %v1886
      %1888 = vmatprep.mubr.bf16.mxu0 0
      %1889 = vmatmul.mubr.bf16.gmra.mxu0 %v1831
      %v1890 = vpop.f32.mrf.mxu0
      %v1891 = vadd.f32 %v1731, %v1890
      %v1892 = vpop.f32.mrf.mxu0
      %v1893 = vadd.f32 %v1731, %v1892
      %v1894 = vpop.f32.mrf.mxu0
      %v1895 = vadd.f32 %v1736, %v1894
      %v1896 = vpop.f32.mrf.mxu0
      %v1897 = vadd.f32 %v1736, %v1896
      %1898 = vmatprep.mubr.bf16.mxu0 0
      %1899 = vmatmul.mubr.bf16.gmra.mxu0 %v1832
      %v1900 = vpop.f32.mrf.mxu0
      %v1901 = vadd.f32 %v1741, %v1900
      %v1902 = vpop.f32.mrf.mxu0
      %v1903 = vadd.f32 %v1741, %v1902
      %v1904 = vpop.f32.mrf.mxu0
      %v1905 = vadd.f32 %v1746, %v1904
      %v1906 = vpop.f32.mrf.mxu0
      %v1907 = vadd.f32 %v1746, %v1906
      %1908 = vmatprep.mubr.bf16.mxu0 0
      %1909 = vmatmul.mubr.bf16.gmra.mxu0 %v1833
      %v1910 = vpop.f32.mrf.mxu0
      %v1911 = vadd.f32 %v1751, %v1910
      %v1912 = vpop.f32.mrf.mxu0
      %v1913 = vadd.f32 %v1751, %v1912
      %v1914 = vpop.f32.mrf.mxu0
      %v1915 = vadd.f32 %v1756, %v1914
      %v1916 = vpop.f32.mrf.mxu0
      %v1917 = vadd.f32 %v1756, %v1916
      %1918 = vmatprep.mubr.bf16.mxu0 0
      %1919 = vmatmul.mubr.bf16.gmra.mxu0 %v1834
      %v1920 = vpop.f32.mrf.mxu0
      %v1921 = vadd.f32 %v1761, %v1920
      %v1922 = vpop.f32.mrf.mxu0
      %v1923 = vadd.f32 %v1761, %v1922
      %v1924 = vpop.f32.mrf.mxu0
      %v1925 = vadd.f32 %v1766, %v1924
      %v1926 = vpop.f32.mrf.mxu0
      %v1927 = vadd.f32 %v1766, %v1926
      %1928 = vmatprep.mubr.bf16.mxu0 0
      %1929 = vmatmul.mubr.bf16.gmra.mxu0 %v1835
      %v1930 = vpop.f32.mrf.mxu0
      %v1931 = vadd.f32 %v1771, %v1930
      %v1932 = vpop.f32.mrf.mxu0
      %v1933 = vadd.f32 %v1771, %v1932
      %v1934 = vpop.f32.mrf.mxu0
      %v1935 = vadd.f32 %v1776, %v1934
      %v1936 = vpop.f32.mrf.mxu0
      %v1937 = vadd.f32 %v1776, %v1936
      %1938 = vmatprep.mubr.bf16.mxu0 0
      %1939 = vmatmul.mubr.bf16.gmra.mxu0 %v1836
      %v1940 = vpop.f32.mrf.mxu0
      %v1941 = vadd.f32 %v1781, %v1940
      %v1942 = vpop.f32.mrf.mxu0
      %v1943 = vadd.f32 %v1781, %v1942
      %v1944 = vpop.f32.mrf.mxu0
      %v1945 = vadd.f32 %v1786, %v1944
      %v1946 = vpop.f32.mrf.mxu0
      %v1947 = vadd.f32 %v1786, %v1946
      %1948 = vmatprep.mubr.bf16.mxu0 0
      %1949 = vmatmul.mubr.bf16.gmra.mxu0 %v1837
      %v1950 = vpop.f32.mrf.mxu0
      %v1951 = vadd.f32 %v1791, %v1950
      %v1952 = vpop.f32.mrf.mxu0
      %v1953 = vadd.f32 %v1791, %v1952
      %v1954 = vpop.f32.mrf.mxu0
      %v1955 = vadd.f32 %v1796, %v1954
      %v1956 = vpop.f32.mrf.mxu0
      %v1957 = vadd.f32 %v1796, %v1956
      %1958 = vdwg.mxu0
      %v1959 = vmul.f32 %v1881, 0.01
      %v1960 = vmul.f32 %v1883, 0.01
      %v1961 = vmul.f32 %v1885, 0.01
      %v1962 = vmul.f32 %v1887, 0.01
      %v1963 = vmul.f32 %v1891, 0.01
      %v1964 = vmul.f32 %v1893, 0.01
      %v1965 = vmul.f32 %v1895, 0.01
      %v1966 = vmul.f32 %v1897, 0.01
      %v1967 = vmul.f32 %v1901, 0.01
      %v1968 = vmul.f32 %v1903, 0.01
      %v1969 = vmul.f32 %v1905, 0.01
      %v1970 = vmul.f32 %v1907, 0.01
      %v1971 = vmul.f32 %v1911, 0.01
      %v1972 = vmul.f32 %v1913, 0.01
      %v1973 = vmul.f32 %v1915, 0.01
      %v1974 = vmul.f32 %v1917, 0.01
      %v1975 = vmul.f32 %v1921, 0.01
      %v1976 = vmul.f32 %v1923, 0.01
      %v1977 = vmul.f32 %v1925, 0.01
      %v1978 = vmul.f32 %v1927, 0.01
      %v1979 = vmul.f32 %v1931, 0.01
      %v1980 = vmul.f32 %v1933, 0.01
      %v1981 = vmul.f32 %v1935, 0.01
      %v1982 = vmul.f32 %v1937, 0.01
      %v1983 = vmul.f32 %v1941, 0.01
      %v1984 = vmul.f32 %v1943, 0.01
      %v1985 = vmul.f32 %v1945, 0.01
      %v1986 = vmul.f32 %v1947, 0.01
      %v1987 = vmul.f32 %v1951, 0.01
      %v1988 = vmul.f32 %v1953, 0.01
      %v1989 = vmul.f32 %v1955, 0.01
      %v1990 = vmul.f32 %v1957, 0.01
      %v1991 = vmax.f32 %v1881, %v1959
      %v1992 = vmax.f32 %v1883, %v1960
      %v1993 = vmax.f32 %v1885, %v1961
      %v1994 = vmax.f32 %v1887, %v1962
      %v1995 = vmax.f32 %v1891, %v1963
      %v1996 = vmax.f32 %v1893, %v1964
      %v1997 = vmax.f32 %v1895, %v1965
      %v1998 = vmax.f32 %v1897, %v1966
      %v1999 = vmax.f32 %v1901, %v1967
      %v2000 = vmax.f32 %v1903, %v1968
      %v2001 = vmax.f32 %v1905, %v1969
      %v2002 = vmax.f32 %v1907, %v1970
      %v2003 = vmax.f32 %v1911, %v1971
      %v2004 = vmax.f32 %v1913, %v1972
      %v2005 = vmax.f32 %v1915, %v1973
      %v2006 = vmax.f32 %v1917, %v1974
      %v2007 = vmax.f32 %v1921, %v1975
      %v2008 = vmax.f32 %v1923, %v1976
      %v2009 = vmax.f32 %v1925, %v1977
      %v2010 = vmax.f32 %v1927, %v1978
      %v2011 = vmax.f32 %v1931, %v1979
      %v2012 = vmax.f32 %v1933, %v1980
      %v2013 = vmax.f32 %v1935, %v1981
      %v2014 = vmax.f32 %v1937, %v1982
      %v2015 = vmax.f32 %v1941, %v1983
      %v2016 = vmax.f32 %v1943, %v1984
      %v2017 = vmax.f32 %v1945, %v1985
      %v2018 = vmax.f32 %v1947, %v1986
      %v2019 = vmax.f32 %v1951, %v1987
      %v2020 = vmax.f32 %v1953, %v1988
      %v2021 = vmax.f32 %v1955, %v1989
      %v2022 = vmax.f32 %v1957, %v1990
      %s2023 = scalar_lea.vmem %s5, 192
      %v2024 = vld [vmem:[%s2023] sm:$0xf]
      %v2025 = vld [vmem:[%s2023 + $0x4] sm:$0xf]
      %v2026 = vld [vmem:[%s2023 + $0x8] sm:$0xf]
      %v2027 = vld [vmem:[%s2023 + $0xc] sm:$0xf]
      %v2028 = vld [vmem:[%s2023 + $0x10] sm:$0xf]
      %v2029 = vld [vmem:[%s2023 + $0x14] sm:$0xf]
      %v2030 = vld [vmem:[%s2023 + $0x18] sm:$0xf]
      %v2031 = vld [vmem:[%s2023 + $0x1c] sm:$0xf]
      %v2032 = vld [vmem:[%s2023 + $0x20] sm:$0xf]
      %v2033 = vld [vmem:[%s2023 + $0x24] sm:$0xf]
      %v2034 = vld [vmem:[%s2023 + $0x28] sm:$0xf]
      %v2035 = vld [vmem:[%s2023 + $0x2c] sm:$0xf]
      %v2036 = vld [vmem:[%s2023 + $0x30] sm:$0xf]
      %v2037 = vld [vmem:[%s2023 + $0x34] sm:$0xf]
      %v2038 = vld [vmem:[%s2023 + $0x38] sm:$0xf]
      %v2039 = vld [vmem:[%s2023 + $0x3c] sm:$0xf]
      %v2040 = vpack.c.bf16 %v1993, %v1991
      %v2041 = vpack.c.bf16 %v1994, %v1992
      %v2042 = vpack.c.bf16 %v1997, %v1995
      %v2043 = vpack.c.bf16 %v1998, %v1996
      %v2044 = vpack.c.bf16 %v2001, %v1999
      %v2045 = vpack.c.bf16 %v2002, %v2000
      %v2046 = vpack.c.bf16 %v2005, %v2003
      %v2047 = vpack.c.bf16 %v2006, %v2004
      %v2048 = vpack.c.bf16 %v2009, %v2007
      %v2049 = vpack.c.bf16 %v2010, %v2008
      %v2050 = vpack.c.bf16 %v2013, %v2011
      %v2051 = vpack.c.bf16 %v2014, %v2012
      %v2052 = vpack.c.bf16 %v2017, %v2015
      %v2053 = vpack.c.bf16 %v2018, %v2016
      %v2054 = vpack.c.bf16 %v2021, %v2019
      %v2055 = vpack.c.bf16 %v2022, %v2020
      %s2056 = scalar_lea.vmem %s6, 384
      %v2057 = vld [vmem:[%s2056] sm:$0xff]
      %v2058 = vld [vmem:[%s2056 + $0x8] sm:$0xff]
      %v2059 = vld [vmem:[%s2056 + $0x10] sm:$0xff]
      %v2060 = vld [vmem:[%s2056 + $0x18] sm:$0xff]
      %v2061 = vld [vmem:[%s2056 + $0x20] sm:$0xff]
      %v2062 = vld [vmem:[%s2056 + $0x28] sm:$0xff]
      %v2063 = vld [vmem:[%s2056 + $0x30] sm:$0xff]
      %v2064 = vld [vmem:[%s2056 + $0x38] sm:$0xff]
      %v2065 = vld [vmem:[%s2056 + $0x40] sm:$0xff]
      %v2066 = vld [vmem:[%s2056 + $0x48] sm:$0xff]
      %v2067 = vld [vmem:[%s2056 + $0x50] sm:$0xff]
      %v2068 = vld [vmem:[%s2056 + $0x58] sm:$0xff]
      %v2069 = vld [vmem:[%s2056 + $0x60] sm:$0xff]
      %v2070 = vld [vmem:[%s2056 + $0x68] sm:$0xff]
      %v2071 = vld [vmem:[%s2056 + $0x70] sm:$0xff]
      %v2072 = vld [vmem:[%s2056 + $0x78] sm:$0xff]
      %2074 = vset.pattern.permute.xlu0 0
      %2075 = vperm.xlu0 %2074, %v2057
      %v2076 = vpop.permute.xlu0 %2075
      %2079 = vset.pattern.permute.xlu0 0
      %2080 = vperm.xlu0 %2079, %v2058
      %v2081 = vpop.permute.xlu0 %2080
      %2084 = vset.pattern.permute.xlu0 0
      %2085 = vperm.xlu0 %2084, %v2059
      %v2086 = vpop.permute.xlu0 %2085
      %2089 = vset.pattern.permute.xlu0 0
      %2090 = vperm.xlu0 %2089, %v2060
      %v2091 = vpop.permute.xlu0 %2090
      %2094 = vset.pattern.permute.xlu0 0
      %2095 = vperm.xlu0 %2094, %v2061
      %v2096 = vpop.permute.xlu0 %2095
      %2099 = vset.pattern.permute.xlu0 0
      %2100 = vperm.xlu0 %2099, %v2062
      %v2101 = vpop.permute.xlu0 %2100
      %2104 = vset.pattern.permute.xlu0 0
      %2105 = vperm.xlu0 %2104, %v2063
      %v2106 = vpop.permute.xlu0 %2105
      %2109 = vset.pattern.permute.xlu0 0
      %2110 = vperm.xlu0 %2109, %v2064
      %v2111 = vpop.permute.xlu0 %2110
      %2114 = vset.pattern.permute.xlu0 0
      %2115 = vperm.xlu0 %2114, %v2065
      %v2116 = vpop.permute.xlu0 %2115
      %2119 = vset.pattern.permute.xlu0 0
      %2120 = vperm.xlu0 %2119, %v2066
      %v2121 = vpop.permute.xlu0 %2120
      %2124 = vset.pattern.permute.xlu0 0
      %2125 = vperm.xlu0 %2124, %v2067
      %v2126 = vpop.permute.xlu0 %2125
      %2129 = vset.pattern.permute.xlu0 0
      %2130 = vperm.xlu0 %2129, %v2068
      %v2131 = vpop.permute.xlu0 %2130
      %2134 = vset.pattern.permute.xlu0 0
      %2135 = vperm.xlu0 %2134, %v2069
      %v2136 = vpop.permute.xlu0 %2135
      %2139 = vset.pattern.permute.xlu0 0
      %2140 = vperm.xlu0 %2139, %v2070
      %v2141 = vpop.permute.xlu0 %2140
      %2144 = vset.pattern.permute.xlu0 0
      %2145 = vperm.xlu0 %2144, %v2071
      %v2146 = vpop.permute.xlu0 %2145
      %2149 = vset.pattern.permute.xlu0 0
      %2150 = vperm.xlu0 %2149, %v2072
      %v2151 = vpop.permute.xlu0 %2150
      %v2169 = vunpack.c.l.b16 %v2024
      %v2170 = vunpack.c.l.b16 %v2025
      %v2171 = vunpack.c.l.b16 %v2026
      %v2172 = vunpack.c.l.b16 %v2027
      %v2173 = vunpack.c.l.b16 %v2028
      %v2174 = vunpack.c.l.b16 %v2029
      %v2175 = vunpack.c.l.b16 %v2030
      %v2176 = vunpack.c.l.b16 %v2031
      %v2177 = vunpack.c.l.b16 %v2032
      %v2178 = vunpack.c.l.b16 %v2033
      %v2179 = vunpack.c.l.b16 %v2034
      %v2180 = vunpack.c.l.b16 %v2035
      %v2181 = vunpack.c.l.b16 %v2036
      %v2182 = vunpack.c.l.b16 %v2037
      %v2183 = vunpack.c.l.b16 %v2038
      %v2184 = vunpack.c.l.b16 %v2039
      %v2185 = vpack.c.b16 %v2170, %v2169
      %v2186 = vpack.c.b16 %v2172, %v2171
      %v2187 = vpack.c.b16 %v2174, %v2173
      %v2188 = vpack.c.b16 %v2176, %v2175
      %v2189 = vpack.c.b16 %v2178, %v2177
      %v2190 = vpack.c.b16 %v2180, %v2179
      %v2191 = vpack.c.b16 %v2182, %v2181
      %v2192 = vpack.c.b16 %v2184, %v2183
      %2201 = vmatprep.subr.bf16.mxu0 %v2055
      %2202 = vmatpush1.bf16.msra.mxu0 %v2054
      %2203 = vmatprep.subr.bf16.mxu0 %v2053
      %2204 = vmatpush1.bf16.msra.mxu0 %v2052
      %2205 = vmatprep.subr.bf16.mxu0 %v2051
      %2206 = vmatpush1.bf16.msra.mxu0 %v2050
      %2207 = vmatprep.subr.bf16.mxu0 %v2049
      %2208 = vmatpush1.bf16.msra.mxu0 %v2048
      %2209 = vmatprep.subr.bf16.mxu0 %v2047
      %2210 = vmatpush1.bf16.msra.mxu0 %v2046
      %2211 = vmatprep.subr.bf16.mxu0 %v2045
      %2212 = vmatpush1.bf16.msra.mxu0 %v2044
      %2213 = vmatprep.subr.bf16.mxu0 %v2043
      %2214 = vmatpush1.bf16.msra.mxu0 %v2042
      %2215 = vmatprep.subr.bf16.mxu0 %v2041
      %2216 = vmatpush1.bf16.msra.mxu0 %v2040
      %2217 = vmatprep.subr.bf16.mxu0 0
      %2218 = vmatpush2.bf16.msra.mxu0 0
      %2219 = vmatprep.subr.bf16.mxu0 0
      %2220 = vmatpush2.bf16.msra.mxu0 0
      %2221 = vmatprep.subr.bf16.mxu0 0
      %2222 = vmatpush2.bf16.msra.mxu0 0
      %2223 = vmatprep.subr.bf16.mxu0 0
      %2224 = vmatpush2.bf16.msra.mxu0 0
      %2225 = vmatprep.subr.bf16.mxu0 0
      %2226 = vmatpush2.bf16.msra.mxu0 0
      %2227 = vmatprep.subr.bf16.mxu0 0
      %2228 = vmatpush2.bf16.msra.mxu0 0
      %2229 = vmatprep.subr.bf16.mxu0 0
      %2230 = vmatpush2.bf16.msra.mxu0 0
      %2231 = vmatprep.subr.bf16.mxu0 0
      %2232 = vmatpush2.bf16.msra.mxu0 0
      %2233 = vmatprep.mubr.bf16.mxu0 0
      %2234 = vmatmul.mubr.bf16.gmra.mxu0 %v2185
      %v2235 = vpop.f32.mrf.mxu0
      %v2236 = vadd.f32 %v2076, %v2235
      %v2237 = vpop.f32.mrf.mxu0
      %v2238 = vadd.f32 %v2076, %v2237
      %v2239 = vpop.f32.mrf.mxu0
      %v2240 = vadd.f32 %v2081, %v2239
      %v2241 = vpop.f32.mrf.mxu0
      %v2242 = vadd.f32 %v2081, %v2241
      %2243 = vmatprep.mubr.bf16.mxu0 0
      %2244 = vmatmul.mubr.bf16.gmra.mxu0 %v2186
      %v2245 = vpop.f32.mrf.mxu0
      %v2246 = vadd.f32 %v2086, %v2245
      %v2247 = vpop.f32.mrf.mxu0
      %v2248 = vadd.f32 %v2086, %v2247
      %v2249 = vpop.f32.mrf.mxu0
      %v2250 = vadd.f32 %v2091, %v2249
      %v2251 = vpop.f32.mrf.mxu0
      %v2252 = vadd.f32 %v2091, %v2251
      %2253 = vmatprep.mubr.bf16.mxu0 0
      %2254 = vmatmul.mubr.bf16.gmra.mxu0 %v2187
      %v2255 = vpop.f32.mrf.mxu0
      %v2256 = vadd.f32 %v2096, %v2255
      %v2257 = vpop.f32.mrf.mxu0
      %v2258 = vadd.f32 %v2096, %v2257
      %v2259 = vpop.f32.mrf.mxu0
      %v2260 = vadd.f32 %v2101, %v2259
      %v2261 = vpop.f32.mrf.mxu0
      %v2262 = vadd.f32 %v2101, %v2261
      %2263 = vmatprep.mubr.bf16.mxu0 0
      %2264 = vmatmul.mubr.bf16.gmra.mxu0 %v2188
      %v2265 = vpop.f32.mrf.mxu0
      %v2266 = vadd.f32 %v2106, %v2265
      %v2267 = vpop.f32.mrf.mxu0
      %v2268 = vadd.f32 %v2106, %v2267
      %v2269 = vpop.f32.mrf.mxu0
      %v2270 = vadd.f32 %v2111, %v2269
      %v2271 = vpop.f32.mrf.mxu0
      %v2272 = vadd.f32 %v2111, %v2271
      %2273 = vmatprep.mubr.bf16.mxu0 0
      %2274 = vmatmul.mubr.bf16.gmra.mxu0 %v2189
      %v2275 = vpop.f32.mrf.mxu0
      %v2276 = vadd.f32 %v2116, %v2275
      %v2277 = vpop.f32.mrf.mxu0
      %v2278 = vadd.f32 %v2116, %v2277
      %v2279 = vpop.f32.mrf.mxu0
      %v2280 = vadd.f32 %v2121, %v2279
      %v2281 = vpop.f32.mrf.mxu0
      %v2282 = vadd.f32 %v2121, %v2281
      %2283 = vmatprep.mubr.bf16.mxu0 0
      %2284 = vmatmul.mubr.bf16.gmra.mxu0 %v2190
      %v2285 = vpop.f32.mrf.mxu0
      %v2286 = vadd.f32 %v2126, %v2285
      %v2287 = vpop.f32.mrf.mxu0
      %v2288 = vadd.f32 %v2126, %v2287
      %v2289 = vpop.f32.mrf.mxu0
      %v2290 = vadd.f32 %v2131, %v2289
      %v2291 = vpop.f32.mrf.mxu0
      %v2292 = vadd.f32 %v2131, %v2291
      %2293 = vmatprep.mubr.bf16.mxu0 0
      %2294 = vmatmul.mubr.bf16.gmra.mxu0 %v2191
      %v2295 = vpop.f32.mrf.mxu0
      %v2296 = vadd.f32 %v2136, %v2295
      %v2297 = vpop.f32.mrf.mxu0
      %v2298 = vadd.f32 %v2136, %v2297
      %v2299 = vpop.f32.mrf.mxu0
      %v2300 = vadd.f32 %v2141, %v2299
      %v2301 = vpop.f32.mrf.mxu0
      %v2302 = vadd.f32 %v2141, %v2301
      %2303 = vmatprep.mubr.bf16.mxu0 0
      %2304 = vmatmul.mubr.bf16.gmra.mxu0 %v2192
      %v2305 = vpop.f32.mrf.mxu0
      %v2306 = vadd.f32 %v2146, %v2305
      %v2307 = vpop.f32.mrf.mxu0
      %v2308 = vadd.f32 %v2146, %v2307
      %v2309 = vpop.f32.mrf.mxu0
      %v2310 = vadd.f32 %v2151, %v2309
      %v2311 = vpop.f32.mrf.mxu0
      %v2312 = vadd.f32 %v2151, %v2311
      %2313 = vdwg.mxu0
      %v2314 = vmul.f32 %v2236, 0.01
      %v2315 = vmul.f32 %v2238, 0.01
      %v2316 = vmul.f32 %v2240, 0.01
      %v2317 = vmul.f32 %v2242, 0.01
      %v2318 = vmul.f32 %v2246, 0.01
      %v2319 = vmul.f32 %v2248, 0.01
      %v2320 = vmul.f32 %v2250, 0.01
      %v2321 = vmul.f32 %v2252, 0.01
      %v2322 = vmul.f32 %v2256, 0.01
      %v2323 = vmul.f32 %v2258, 0.01
      %v2324 = vmul.f32 %v2260, 0.01
      %v2325 = vmul.f32 %v2262, 0.01
      %v2326 = vmul.f32 %v2266, 0.01
      %v2327 = vmul.f32 %v2268, 0.01
      %v2328 = vmul.f32 %v2270, 0.01
      %v2329 = vmul.f32 %v2272, 0.01
      %v2330 = vmul.f32 %v2276, 0.01
      %v2331 = vmul.f32 %v2278, 0.01
      %v2332 = vmul.f32 %v2280, 0.01
      %v2333 = vmul.f32 %v2282, 0.01
      %v2334 = vmul.f32 %v2286, 0.01
      %v2335 = vmul.f32 %v2288, 0.01
      %v2336 = vmul.f32 %v2290, 0.01
      %v2337 = vmul.f32 %v2292, 0.01
      %v2338 = vmul.f32 %v2296, 0.01
      %v2339 = vmul.f32 %v2298, 0.01
      %v2340 = vmul.f32 %v2300, 0.01
      %v2341 = vmul.f32 %v2302, 0.01
      %v2342 = vmul.f32 %v2306, 0.01
      %v2343 = vmul.f32 %v2308, 0.01
      %v2344 = vmul.f32 %v2310, 0.01
      %v2345 = vmul.f32 %v2312, 0.01
      %v2346 = vmax.f32 %v2236, %v2314
      %v2347 = vmax.f32 %v2238, %v2315
      %v2348 = vmax.f32 %v2240, %v2316
      %v2349 = vmax.f32 %v2242, %v2317
      %v2350 = vmax.f32 %v2246, %v2318
      %v2351 = vmax.f32 %v2248, %v2319
      %v2352 = vmax.f32 %v2250, %v2320
      %v2353 = vmax.f32 %v2252, %v2321
      %v2354 = vmax.f32 %v2256, %v2322
      %v2355 = vmax.f32 %v2258, %v2323
      %v2356 = vmax.f32 %v2260, %v2324
      %v2357 = vmax.f32 %v2262, %v2325
      %v2358 = vmax.f32 %v2266, %v2326
      %v2359 = vmax.f32 %v2268, %v2327
      %v2360 = vmax.f32 %v2270, %v2328
      %v2361 = vmax.f32 %v2272, %v2329
      %v2362 = vmax.f32 %v2276, %v2330
      %v2363 = vmax.f32 %v2278, %v2331
      %v2364 = vmax.f32 %v2280, %v2332
      %v2365 = vmax.f32 %v2282, %v2333
      %v2366 = vmax.f32 %v2286, %v2334
      %v2367 = vmax.f32 %v2288, %v2335
      %v2368 = vmax.f32 %v2290, %v2336
      %v2369 = vmax.f32 %v2292, %v2337
      %v2370 = vmax.f32 %v2296, %v2338
      %v2371 = vmax.f32 %v2298, %v2339
      %v2372 = vmax.f32 %v2300, %v2340
      %v2373 = vmax.f32 %v2302, %v2341
      %v2374 = vmax.f32 %v2306, %v2342
      %v2375 = vmax.f32 %v2308, %v2343
      %v2376 = vmax.f32 %v2310, %v2344
      %v2377 = vmax.f32 %v2312, %v2345
      %v2378 = vadd.f32 %v928, %v2346
      %v2379 = vadd.f32 %v929, %v2347
      %v2380 = vadd.f32 %v930, %v2348
      %v2381 = vadd.f32 %v931, %v2349
      %v2382 = vadd.f32 %v932, %v2350
      %v2383 = vadd.f32 %v933, %v2351
      %v2384 = vadd.f32 %v934, %v2352
      %v2385 = vadd.f32 %v935, %v2353
      %v2386 = vadd.f32 %v936, %v2354
      %v2387 = vadd.f32 %v937, %v2355
      %v2388 = vadd.f32 %v938, %v2356
      %v2389 = vadd.f32 %v939, %v2357
      %v2390 = vadd.f32 %v940, %v2358
      %v2391 = vadd.f32 %v941, %v2359
      %v2392 = vadd.f32 %v942, %v2360
      %v2393 = vadd.f32 %v943, %v2361
      %v2394 = vadd.f32 %v944, %v2362
      %v2395 = vadd.f32 %v945, %v2363
      %v2396 = vadd.f32 %v946, %v2364
      %v2397 = vadd.f32 %v947, %v2365
      %v2398 = vadd.f32 %v948, %v2366
      %v2399 = vadd.f32 %v949, %v2367
      %v2400 = vadd.f32 %v950, %v2368
      %v2401 = vadd.f32 %v951, %v2369
      %v2402 = vadd.f32 %v952, %v2370
      %v2403 = vadd.f32 %v953, %v2371
      %v2404 = vadd.f32 %v954, %v2372
      %v2405 = vadd.f32 %v955, %v2373
      %v2406 = vadd.f32 %v956, %v2374
      %v2407 = vadd.f32 %v957, %v2375
      %v2408 = vadd.f32 %v958, %v2376
      %v2409 = vadd.f32 %v959, %v2377
      %v2410 = vld [vmem:[%s7] sm:$0xf]
      %v2411 = vld [vmem:[%s7 + $0x4] sm:$0xf]
      %v2412 = vld [vmem:[%s7 + $0x8] sm:$0xf]
      %v2413 = vld [vmem:[%s7 + $0xc] sm:$0xf]
      %v2414 = vld [vmem:[%s7 + $0x10] sm:$0xf]
      %v2415 = vld [vmem:[%s7 + $0x14] sm:$0xf]
      %v2416 = vld [vmem:[%s7 + $0x18] sm:$0xf]
      %v2417 = vld [vmem:[%s7 + $0x1c] sm:$0xf]
      %v2418 = vpack.c.bf16 %v2380, %v2378
      %v2419 = vpack.c.bf16 %v2381, %v2379
      %v2420 = vpack.c.bf16 %v2384, %v2382
      %v2421 = vpack.c.bf16 %v2385, %v2383
      %v2422 = vpack.c.bf16 %v2388, %v2386
      %v2423 = vpack.c.bf16 %v2389, %v2387
      %v2424 = vpack.c.bf16 %v2392, %v2390
      %v2425 = vpack.c.bf16 %v2393, %v2391
      %v2426 = vpack.c.bf16 %v2396, %v2394
      %v2427 = vpack.c.bf16 %v2397, %v2395
      %v2428 = vpack.c.bf16 %v2400, %v2398
      %v2429 = vpack.c.bf16 %v2401, %v2399
      %v2430 = vpack.c.bf16 %v2404, %v2402
      %v2431 = vpack.c.bf16 %v2405, %v2403
      %v2432 = vpack.c.bf16 %v2408, %v2406
      %v2433 = vpack.c.bf16 %v2409, %v2407
      %v2434 = vld [vmem:[%s8] sm:$0xff]
      %v2435 = vld [vmem:[%s8 + $0x8] sm:$0xff]
      %v2436 = vld [vmem:[%s8 + $0x10] sm:$0xff]
      %v2437 = vld [vmem:[%s8 + $0x18] sm:$0xff]
      %v2438 = vld [vmem:[%s8 + $0x20] sm:$0xff]
      %v2439 = vld [vmem:[%s8 + $0x28] sm:$0xff]
      %v2440 = vld [vmem:[%s8 + $0x30] sm:$0xff]
      %v2441 = vld [vmem:[%s8 + $0x38] sm:$0xff]
      %2443 = vset.pattern.permute.xlu0 0
      %2444 = vperm.xlu0 %2443, %v2434
      %v2445 = vpop.permute.xlu0 %2444
      %2448 = vset.pattern.permute.xlu0 0
      %2449 = vperm.xlu0 %2448, %v2435
      %v2450 = vpop.permute.xlu0 %2449
      %2453 = vset.pattern.permute.xlu0 0
      %2454 = vperm.xlu0 %2453, %v2436
      %v2455 = vpop.permute.xlu0 %2454
      %2458 = vset.pattern.permute.xlu0 0
      %2459 = vperm.xlu0 %2458, %v2437
      %v2460 = vpop.permute.xlu0 %2459
      %2463 = vset.pattern.permute.xlu0 0
      %2464 = vperm.xlu0 %2463, %v2438
      %v2465 = vpop.permute.xlu0 %2464
      %2468 = vset.pattern.permute.xlu0 0
      %2469 = vperm.xlu0 %2468, %v2439
      %v2470 = vpop.permute.xlu0 %2469
      %2473 = vset.pattern.permute.xlu0 0
      %2474 = vperm.xlu0 %2473, %v2440
      %v2475 = vpop.permute.xlu0 %2474
      %2478 = vset.pattern.permute.xlu0 0
      %2479 = vperm.xlu0 %2478, %v2441
      %v2480 = vpop.permute.xlu0 %2479
      %v2490 = vunpack.c.l.b16 %v2410
      %v2491 = vunpack.c.l.b16 %v2411
      %v2492 = vunpack.c.l.b16 %v2412
      %v2493 = vunpack.c.l.b16 %v2413
      %v2494 = vunpack.c.l.b16 %v2414
      %v2495 = vunpack.c.l.b16 %v2415
      %v2496 = vunpack.c.l.b16 %v2416
      %v2497 = vunpack.c.l.b16 %v2417
      %v2498 = vpack.c.b16 %v2491, %v2490
      %v2499 = vpack.c.b16 %v2493, %v2492
      %v2500 = vpack.c.b16 %v2495, %v2494
      %v2501 = vpack.c.b16 %v2497, %v2496
      %2506 = vmatprep.subr.bf16.mxu0 %v2433
      %2507 = vmatpush1.bf16.msra.mxu0 %v2432
      %2508 = vmatprep.subr.bf16.mxu0 %v2431
      %2509 = vmatpush1.bf16.msra.mxu0 %v2430
      %2510 = vmatprep.subr.bf16.mxu0 %v2429
      %2511 = vmatpush1.bf16.msra.mxu0 %v2428
      %2512 = vmatprep.subr.bf16.mxu0 %v2427
      %2513 = vmatpush1.bf16.msra.mxu0 %v2426
      %2514 = vmatprep.subr.bf16.mxu0 %v2425
      %2515 = vmatpush1.bf16.msra.mxu0 %v2424
      %2516 = vmatprep.subr.bf16.mxu0 %v2423
      %2517 = vmatpush1.bf16.msra.mxu0 %v2422
      %2518 = vmatprep.subr.bf16.mxu0 %v2421
      %2519 = vmatpush1.bf16.msra.mxu0 %v2420
      %2520 = vmatprep.subr.bf16.mxu0 %v2419
      %2521 = vmatpush1.bf16.msra.mxu0 %v2418
      %2522 = vmatprep.subr.bf16.mxu0 0
      %2523 = vmatpush2.bf16.msra.mxu0 0
      %2524 = vmatprep.subr.bf16.mxu0 0
      %2525 = vmatpush2.bf16.msra.mxu0 0
      %2526 = vmatprep.subr.bf16.mxu0 0
      %2527 = vmatpush2.bf16.msra.mxu0 0
      %2528 = vmatprep.subr.bf16.mxu0 0
      %2529 = vmatpush2.bf16.msra.mxu0 0
      %2530 = vmatprep.subr.bf16.mxu0 0
      %2531 = vmatpush2.bf16.msra.mxu0 0
      %2532 = vmatprep.subr.bf16.mxu0 0
      %2533 = vmatpush2.bf16.msra.mxu0 0
      %2534 = vmatprep.subr.bf16.mxu0 0
      %2535 = vmatpush2.bf16.msra.mxu0 0
      %2536 = vmatprep.subr.bf16.mxu0 0
      %2537 = vmatpush2.bf16.msra.mxu0 0
      %2538 = vmatprep.mubr.bf16.mxu0 0
      %2539 = vmatmul.mubr.bf16.gmra.mxu0 %v2498
      %v2540 = vpop.f32.mrf.mxu0
      %v2541 = vadd.f32 %v2445, %v2540
      %v2542 = vpop.f32.mrf.mxu0
      %v2543 = vadd.f32 %v2445, %v2542
      %v2544 = vpop.f32.mrf.mxu0
      %v2545 = vadd.f32 %v2450, %v2544
      %v2546 = vpop.f32.mrf.mxu0
      %v2547 = vadd.f32 %v2450, %v2546
      %2548 = vmatprep.mubr.bf16.mxu0 0
      %2549 = vmatmul.mubr.bf16.gmra.mxu0 %v2499
      %v2550 = vpop.f32.mrf.mxu0
      %v2551 = vadd.f32 %v2455, %v2550
      %v2552 = vpop.f32.mrf.mxu0
      %v2553 = vadd.f32 %v2455, %v2552
      %v2554 = vpop.f32.mrf.mxu0
      %v2555 = vadd.f32 %v2460, %v2554
      %v2556 = vpop.f32.mrf.mxu0
      %v2557 = vadd.f32 %v2460, %v2556
      %2558 = vmatprep.mubr.bf16.mxu0 0
      %2559 = vmatmul.mubr.bf16.gmra.mxu0 %v2500
      %v2560 = vpop.f32.mrf.mxu0
      %v2561 = vadd.f32 %v2465, %v2560
      %v2562 = vpop.f32.mrf.mxu0
      %v2563 = vadd.f32 %v2465, %v2562
      %v2564 = vpop.f32.mrf.mxu0
      %v2565 = vadd.f32 %v2470, %v2564
      %v2566 = vpop.f32.mrf.mxu0
      %v2567 = vadd.f32 %v2470, %v2566
      %2568 = vmatprep.mubr.bf16.mxu0 0
      %2569 = vmatmul.mubr.bf16.gmra.mxu0 %v2501
      %v2570 = vpop.f32.mrf.mxu0
      %v2571 = vadd.f32 %v2475, %v2570
      %v2572 = vpop.f32.mrf.mxu0
      %v2573 = vadd.f32 %v2475, %v2572
      %v2574 = vpop.f32.mrf.mxu0
      %v2575 = vadd.f32 %v2480, %v2574
      %v2576 = vpop.f32.mrf.mxu0
      %v2577 = vadd.f32 %v2480, %v2576
      %2578 = vdwg.mxu0
      %v2579 = vmul.f32 %v2541, 0.01
      %v2580 = vmul.f32 %v2543, 0.01
      %v2581 = vmul.f32 %v2545, 0.01
      %v2582 = vmul.f32 %v2547, 0.01
      %v2583 = vmul.f32 %v2551, 0.01
      %v2584 = vmul.f32 %v2553, 0.01
      %v2585 = vmul.f32 %v2555, 0.01
      %v2586 = vmul.f32 %v2557, 0.01
      %v2587 = vmul.f32 %v2561, 0.01
      %v2588 = vmul.f32 %v2563, 0.01
      %v2589 = vmul.f32 %v2565, 0.01
      %v2590 = vmul.f32 %v2567, 0.01
      %v2591 = vmul.f32 %v2571, 0.01
      %v2592 = vmul.f32 %v2573, 0.01
      %v2593 = vmul.f32 %v2575, 0.01
      %v2594 = vmul.f32 %v2577, 0.01
      %v2595 = vmax.f32 %v2541, %v2579
      %v2596 = vmax.f32 %v2543, %v2580
      %v2597 = vmax.f32 %v2545, %v2581
      %v2598 = vmax.f32 %v2547, %v2582
      %v2599 = vmax.f32 %v2551, %v2583
      %v2600 = vmax.f32 %v2553, %v2584
      %v2601 = vmax.f32 %v2555, %v2585
      %v2602 = vmax.f32 %v2557, %v2586
      %v2603 = vmax.f32 %v2561, %v2587
      %v2604 = vmax.f32 %v2563, %v2588
      %v2605 = vmax.f32 %v2565, %v2589
      %v2606 = vmax.f32 %v2567, %v2590
      %v2607 = vmax.f32 %v2571, %v2591
      %v2608 = vmax.f32 %v2573, %v2592
      %v2609 = vmax.f32 %v2575, %v2593
      %v2610 = vmax.f32 %v2577, %v2594
      %v2611 = vld [vmem:[%s9] sm:$0x1]
      %v2612 = vpack.c.bf16 %v2597, %v2595
      %v2613 = vpack.c.bf16 %v2598, %v2596
      %v2614 = vpack.c.bf16 %v2601, %v2599
      %v2615 = vpack.c.bf16 %v2602, %v2600
      %v2616 = vpack.c.bf16 %v2605, %v2603
      %v2617 = vpack.c.bf16 %v2606, %v2604
      %v2618 = vpack.c.bf16 %v2609, %v2607
      %v2619 = vpack.c.bf16 %v2610, %v2608
      %v2620 = vld [vmem:[#allocation2] sm:$0x1]
      %2622 = vset.pattern.permute.xlu0 0
      %2623 = vperm.xlu0 %2622, %v2620
      %v2624 = vpop.permute.xlu0 %2623
      %v2626 = vlaneseq
      %v2627 = vshrl.u32 %v2626, 7
      %v2628 = vsub.s32 0, %v2627
      %v2629 = vrot.slane %v2624, %v2628
      %v2631 = vsel %vm758, %v2611, 0
      %2633 = vmatprep.subr.bf16.mxu0 0
      %2634 = vmatpush1.bf16.msra.mxu0 0
      %2635 = vmatprep.subr.bf16.mxu0 0
      %2636 = vmatpush1.bf16.msra.mxu0 0
      %2637 = vmatprep.subr.bf16.mxu0 0
      %2638 = vmatpush1.bf16.msra.mxu0 0
      %2639 = vmatprep.subr.bf16.mxu0 0
      %2640 = vmatpush1.bf16.msra.mxu0 0
      %2641 = vmatprep.subr.bf16.mxu0 %v2619
      %2642 = vmatpush1.bf16.msra.mxu0 %v2618
      %2643 = vmatprep.subr.bf16.mxu0 %v2617
      %2644 = vmatpush1.bf16.msra.mxu0 %v2616
      %2645 = vmatprep.subr.bf16.mxu0 %v2615
      %2646 = vmatpush1.bf16.msra.mxu0 %v2614
      %2647 = vmatprep.subr.bf16.mxu0 %v2613
      %2648 = vmatpush1.bf16.msra.mxu0 %v2612
      %2649 = vmatprep.subr.bf16.mxu0 0
      %2650 = vmatpush2.bf16.msra.mxu0 0
      %2651 = vmatprep.subr.bf16.mxu0 0
      %2652 = vmatpush2.bf16.msra.mxu0 0
      %2653 = vmatprep.subr.bf16.mxu0 0
      %2654 = vmatpush2.bf16.msra.mxu0 0
      %2655 = vmatprep.subr.bf16.mxu0 0
      %2656 = vmatpush2.bf16.msra.mxu0 0
      %2657 = vmatprep.subr.bf16.mxu0 0
      %2658 = vmatpush2.bf16.msra.mxu0 0
      %2659 = vmatprep.subr.bf16.mxu0 0
      %2660 = vmatpush2.bf16.msra.mxu0 0
      %2661 = vmatprep.subr.bf16.mxu0 0
      %2662 = vmatpush2.bf16.msra.mxu0 0
      %2663 = vmatprep.subr.bf16.mxu0 0
      %2664 = vmatpush2.bf16.msra.mxu0 0
      %2665 = vmatprep.mubr.bf16.mxu0 0
      %2666 = vmatmul.mubr.bf16.gmra.mxu0 %v2631
      %v2667 = vpop.f32.mrf.mxu0
      %v2668 = vadd.f32 %v2629, %v2667
      %v2669 = vpop.f32.mrf.mxu0
      %v2670 = vadd.f32 %v2629, %v2669
      %v2671 = vpop.f32.mrf.mxu0
      %v2672 = vpop.f32.mrf.mxu0
      %2673 = vdwg.mxu0
      %v2674 = vxor.u32 %v2668, 2147483648
      %v2675 = vxor.u32 %v2670, 2147483648
      %v2676 = vmul.f32 %v2674, 1.442695
      %v2677 = vpow.pop %v2676
      %v2678 = vmul.f32 %v2675, 1.442695
      %v2679 = vpow.pop %v2678
      %v2680 = vadd.f32 %v2677, 1.0
      %v2681 = vadd.f32 %v2679, 1.0
      %v2682 = vrcp.pop %v2680
      %v2683 = vmul.f32 1.0, %v2682
      %v2684 = vrcp.pop %v2681
      %v2685 = vmul.f32 1.0, %v2684
      %v2688 = vcombine.low %v2683, %v2685
      %v2690 = vunpack.c.l.s4 1966171168
      %v2691 = vunpack.c.0.s8 %v2690
      %v2692 = vlaneseq
      %v2693 = vshrl.u32 %v2692, 7
      %v2694 = vsub.s32 %v2691, %v2693
      %v2695 = vrot.slane %v2688, %v2694
      %v2697 = vunpack.c.l.s4 1966171168
      %v2698 = vunpack.c.0.s8 %v2697
      %v2699 = vlaneseq
      %v2700 = vshrl.u32 %v2699, 7
      %v2701 = vsub.s32 %v2698, %v2700
      %v2702 = vrot.slane %v2695, %v2701
      %v2704 = vlaneseq
      %vm2705 = vcmp.ge.s32.totalorder %v2704, 0
      %vm2706 = vcmp.lt.s32.totalorder %v2704, 256
      %vm2707 = vmand %vm2705, %vm2706
      %2708 = vst.msk [vmem:[%s388] sm:$0x3] %vm2707, %v2702
      %s2709 = smul.u32 2, %s24
      %p2710 = scmp.lt.s32.totalorder %s2709, 3
      %s2711 = scalar_select %p2710, %s2709, 3
      %s2712 = scalar_lea.vmem %s11, %s2711
      // Predicated region
      $region65: #{neural_vis_forward.1} parent=63 // pred_check
        %p2713 = pneg %p278
      $region66: #{neural_vis_forward.1} parent=63 // pred_check_branch
        %2715 = sbr.rel (%p2713) target = $region68
      $region67: #{neural_vis_forward.1} parent=63 // pred_region
        %s2716 = smul.u32 2, %s24
      $region68: #{neural_vis_forward.1} parent=63 // pred_fallthru
        _
    $region64: #{neural_vis_forward.1} parent=5 // pred_fallthru
      _
    %p2717 = scmp.le.s32.totalorder 2, %s19
    // Predicated region
    $region69: #{neural_vis_forward.1} parent=5 // pred_check
      %p2718 = pneg %p2717
    $region70: #{neural_vis_forward.1} parent=5 // pred_check_branch
      %2720 = sbr.rel (%p2718) target = $region72
    $region71: #{neural_vis_forward.1} parent=5 // pred_region
      %s2721 = ssub.s32 %s19, 2
      // Predicated region
      $region73: #{neural_vis_forward.1} parent=71 // pred_check
        %p2722 = pneg %p284
      $region74: #{neural_vis_forward.1} parent=71 // pred_check_branch
        %2724 = sbr.rel (%p2722) target = $region76
      $region75: #{neural_vis_forward.1} parent=71 // pred_region
        %s2725 = smul.u32 2, %s25
        %p2726 = scmp.lt.s32.totalorder %s2725, 3
        %s2727 = scalar_select %p2726, %s2725, 3
        %s2728 = scalar_lea.vmem %s11, %s2727
      $region76: #{neural_vis_forward.1} parent=71 // pred_fallthru
        _
    $region72: #{neural_vis_forward.1} parent=5 // pred_fallthru
      _
  $region6: #{neural_vis_forward.1} parent=0 // loop_footer
    %s23 = sadd.s32 1, %s19
  $region7: #{neural_vis_forward.1} parent=0 // loop_footer_branch
    %18 = sbr.rel target = $region3
  $region8: #{neural_vis_forward.1} parent=0 // loop_exit
    _

</llo_original>
